<compile_context>
chip_gen: v7x
topology: tpu7x:2x2x1
jax: 0.10.0
libtpu: 0.0.40
codegen_flags: <defaults>
</compile_context>

<pallas_src>
import numpy as np
import jax
import jax.numpy as jnp
from jax import lax
from jax.experimental import pallas as pl
from jax.experimental.pallas import tpu as pltpu

NUM_GROUPS = 32
EPS = 1e-6


# ---------------------------------------------------------------------------
# Hardware / feature helpers
# ---------------------------------------------------------------------------
def _prefers_small_tiles():
    """v5e (and older) are compute-bound with 1 vst slot: keep 128/256 tiles.
    v6e/v7x benefit from 512-class tiles (K/V re-streaming)."""
    try:
        kind = jax.devices()[0].device_kind.lower()
    except Exception:
        return False
    return ("v5" in kind) or ("v4" in kind) or ("v3" in kind)


_SINGLE_BUFFER_OK = None


def _single_buffer_supported():
    """Feature-detect pl.Buffered(1) by compiling a tiny probe kernel.

    Scoped probe (per review): the real kernels are never wrapped in a blanket
    try/except, so genuine tracing/compile errors surface immediately.
    """
    global _SINGLE_BUFFER_OK
    if _SINGLE_BUFFER_OK is not None:
        return _SINGLE_BUFFER_OK
    if not hasattr(pl, "Buffered"):
        _SINGLE_BUFFER_OK = False
        return False
    try:
        def _probe_kernel(c_ref, x_ref, o_ref):
            o_ref[...] = x_ref[...] + c_ref[...]

        x = jnp.zeros((8, 128), jnp.float32)
        out = pl.pallas_call(
            _probe_kernel,
            out_shape=jax.ShapeDtypeStruct((8, 128), jnp.float32),
            grid=(2,),
            in_specs=[
                pl.BlockSpec((8, 128), lambda i: (0, 0),
                             pipeline_mode=pl.Buffered(1)),
                pl.BlockSpec((8, 128), lambda i: (0, 0)),
            ],
            out_specs=pl.BlockSpec((8, 128), lambda i: (0, 0)),
        )(x, x)
        jax.block_until_ready(out)
        _SINGLE_BUFFER_OK = True
    except Exception:
        _SINGLE_BUFFER_OK = False
    return _SINGLE_BUFFER_OK


def _const_spec(shape, index_map, single_buffer):
    # Grid-constant operands (weights / biases): request single buffering so the
    # pipeline does not double-buffer data whose block index never changes
    # (VMEM headroom; matters most on v7x's 64 MiB).
    if single_buffer:
        return pl.BlockSpec(shape, index_map, pipeline_mode=pl.Buffered(1))
    return pl.BlockSpec(shape, index_map)


def _largest_divisor(n, candidates):
    for c in candidates:
        if n % c == 0:
            return c
    return n


def _pick_spatial_tile(n, small_tiles):
    cands = (512, 256, 128) if small_tiles else (1024, 512, 256, 128)
    return _largest_divisor(n, cands)


def _pick_attn_tiles(n, small_tiles):
    if n <= 512:
        t = _largest_divisor(n, (128,))
        return t, t
    if small_tiles:                       # v5e: MXU-bound, larger tiles don't help
        return (_largest_divisor(n, (256, 128)),
                _largest_divisor(n, (256, 128)))
    # v6e / v7x: bigger query tile cuts K/V HBM re-streaming 2-4x.
    return (_largest_divisor(n, (512, 256, 128)),
            _largest_divisor(n, (512, 256, 128)))


def _vmem_limit(buffer_bytes):
    # 2x headroom for in-kernel temporaries / compiler scratch; never request
    # more than ~60 MiB so the limit stays inside v7x's 64 MiB physical VMEM.
    est = 2 * int(buffer_bytes) + (8 << 20)
    return int(max(16 << 20, min(est, 60 << 20)))


# ---------------------------------------------------------------------------
# Kernel 1: GroupNorm (precomputed per-channel scale/shift) + q/k/v 1x1 convs
# ---------------------------------------------------------------------------
def _norm_qkv_kernel(x_ref, scale_ref, shift_ref,
                     wq_ref, bq_ref, wk_ref, bk_ref, wv_ref, bv_ref,
                     q_ref, k_ref, v_ref):
    # x tile: (C, TN) channel-major (the stored NCHW layout); scale/shift: (C, 1).
    xn_cm = (x_ref[0] * scale_ref[0] + shift_ref[0]).astype(jnp.bfloat16)

    # K emitted channel-major: (Cout, Cin) @ (Cin, TN) -> (C, TN).  Lane-dense
    # output; kernel 2 consumes it with a plain (no-transpose) dot.
    k = jnp.dot(wk_ref[...], xn_cm, preferred_element_type=jnp.float32)
    k_ref[0] = (k + bk_ref[...]).astype(jnp.bfloat16)

    # Single bf16 tile transpose serves both token-major outputs (q and v).
    xn_tok = xn_cm.T                                            # (TN, C) bf16

    q = jnp.dot(xn_tok, wq_ref[...], preferred_element_type=jnp.float32)
    q_ref[0] = (q + bq_ref[...]).astype(jnp.bfloat16)           # 1/sqrt(C) folded in

    v = jnp.dot(xn_tok, wv_ref[...], preferred_element_type=jnp.float32)
    v_ref[0] = (v + bv_ref[...]).astype(jnp.bfloat16)


# ---------------------------------------------------------------------------
# Kernel 2: flash-style attention (online softmax) + proj_out + residual
# ---------------------------------------------------------------------------
def _attn_proj_kernel(q_ref, k_ref, v_ref, x_ref, wp_ref, bp_ref,
                      o_ref, m_ref, l_ref, acc_ref):
    ki = pl.program_id(2)

    q = q_ref[0]                            # (TQ, C) bf16, pre-scaled by C^-0.5
    k = k_ref[0]                            # (C, TK) bf16 (channel-major)
    v = v_ref[0]                            # (TK, C) bf16

    # Plain (TQ, C) @ (C, TK) dot on the MXU — no per-step K transpose.
    s = jnp.dot(q, k, preferred_element_type=jnp.float32)       # (TQ, TK)
    m_tile = jnp.max(s, axis=-1, keepdims=True)                 # (TQ, 1)

    @pl.when(ki == 0)
    def _first_kv_tile():
        # Initialize running stats directly from the first tile (no rescale path).
        p = jnp.exp(s - m_tile)
        m_ref[...] = m_tile
        l_ref[...] = jnp.sum(p, axis=-1, keepdims=True)
        acc_ref[...] = jnp.dot(p.astype(jnp.bfloat16), v,
                               preferred_element_type=jnp.float32)

    @pl.when(ki > 0)
    def _update_kv_tile():
        m_prev = m_ref[...]
        m_new = jnp.maximum(m_prev, m_tile)
        alpha = jnp.exp(m_prev - m_new)                          # (TQ, 1)
        p = jnp.exp(s - m_new)                                   # (TQ, TK)
        l_ref[...] = alpha * l_ref[...] + jnp.sum(p, axis=-1, keepdims=True)
        acc_ref[...] = alpha * acc_ref[...] + jnp.dot(
            p.astype(jnp.bfloat16), v, preferred_element_type=jnp.float32)
        m_ref[...] = m_new

    @pl.when(ki == pl.num_programs(2) - 1)
    def _finalize():
        inv_l = pl.reciprocal(l_ref[...], approx=True)           # (TQ, 1), EUP
        out_tok = (acc_ref[...] * inv_l).astype(jnp.bfloat16)    # (TQ, C)
        # proj_out emitted channel-major (lane-dense): (Cout, Cin) . out_tok^T.
        # (trans_b dot only once per *query* tile, not per KV step.)
        y = lax.dot_general(wp_ref[...], out_tok, (((1,), (1,)), ((), ())),
                            preferred_element_type=jnp.float32)  # (C, TQ)
        o_ref[0] = x_ref[0] + y + bp_ref[...]


# ---------------------------------------------------------------------------
# Wrapper
# ---------------------------------------------------------------------------
def attn_block(x_nchw, params):
    B, C, H, W = x_nchw.shape
    N = H * W
    G = NUM_GROUPS
    assert C % G == 0, "GroupNorm(32) requires channels divisible by 32"

    single_buffer = _single_buffer_supported()
    small_tiles = _prefers_small_tiles()

    # NCHW -> (B, C, N) is a free reshape (no transpose).
    x_cn = x_nchw.reshape(B, C, N).astype(jnp.float32)

    # --- GroupNorm statistics: tiny XLA reduction -> per-(b, c) scale / shift ---
    cg = C // G
    xg = x_cn.reshape(B, G, cg * N)
    mean_g = jnp.mean(xg, axis=-1)                               # (B, G)
    var_g = jnp.var(xg, axis=-1)                                 # (B, G)
    inv_g = lax.rsqrt(var_g + EPS)
    gamma = params["gamma"].reshape(C).astype(jnp.float32)
    beta = params["beta"].reshape(C).astype(jnp.float32)
    mean_c = jnp.repeat(mean_g, cg, axis=1)                      # (B, C)
    inv_c = jnp.repeat(inv_g, cg, axis=1)                        # (B, C)
    scale_c = (inv_c * gamma[None, :]).reshape(B, C, 1).astype(jnp.float32)
    shift_c = (beta[None, :] - mean_c * inv_c * gamma[None, :]
               ).reshape(B, C, 1).astype(jnp.float32)

    # --- weight prep: 1x1 convs as matmuls; attention scale folded into q ---
    attn_scale = float(C) ** (-0.5)
    wq_t = (params["wq"].reshape(C, C).T * attn_scale).astype(jnp.bfloat16)
    bq_r = (params["bq"].reshape(1, C) * attn_scale).astype(jnp.float32)
    wk_m = params["wk"].reshape(C, C).astype(jnp.bfloat16)
    bk_c = params["bk"].reshape(C, 1).astype(jnp.float32)
    wv_t = params["wv"].reshape(C, C).T.astype(jnp.bfloat16)
    bv_r = params["bv"].reshape(1, C).astype(jnp.float32)
    wp_m = params["wp"].reshape(C, C).astype(jnp.bfloat16)
    bp_c = params["bp"].reshape(C, 1).astype(jnp.float32)

    # ------------- Kernel 1: normalize + q/k/v, tiled over N -------------
    TN = _pick_spatial_tile(N, small_tiles)
    nn = N // TN
    c1 = lambda shape: _const_spec(shape, lambda b, n: (0, 0), single_buffer)

    k1_bufs = (2 * C * TN * 4                                     # x (f32, dbl-buf)
               + 2 * 2 * C * 4                                    # scale, shift
               + (1 if single_buffer else 2) * (3 * C * C * 2 + 3 * C * 4)
               + 2 * 3 * TN * C * 2)                              # q/k/v out (bf16)

    q_tok, k_cm, v_tok = pl.pallas_call(
        _norm_qkv_kernel,
        out_shape=(jax.ShapeDtypeStruct((B, N, C), jnp.bfloat16),
                   jax.ShapeDtypeStruct((B, C, N), jnp.bfloat16),
                   jax.ShapeDtypeStruct((B, N, C), jnp.bfloat16)),
        grid_spec=pltpu.PrefetchScalarGridSpec(
            num_scalar_prefetch=0,
            grid=(B, nn),
            in_specs=[
                pl.BlockSpec((1, C, TN), lambda b, n: (b, 0, n)),    # x
                pl.BlockSpec((1, C, 1), lambda b, n: (b, 0, 0)),     # scale
                pl.BlockSpec((1, C, 1), lambda b, n: (b, 0, 0)),     # shift
                c1((C, C)), c1((1, C)),                              # wq, bq
                c1((C, C)), c1((C, 1)),                              # wk, bk
                c1((C, C)), c1((1, C)),                              # wv, bv
            ],
            out_specs=[
                pl.BlockSpec((1, TN, C), lambda b, n: (b, n, 0)),    # q token-major
                pl.BlockSpec((1, C, TN), lambda b, n: (b, 0, n)),    # k channel-major
                pl.BlockSpec((1, TN, C), lambda b, n: (b, n, 0)),    # v token-major
            ],
        ),
        compiler_params=pltpu.CompilerParams(
            dimension_semantics=("parallel", "parallel"),
            vmem_limit_bytes=_vmem_limit(k1_bufs)),
    )(x_cn, scale_c, shift_c, wq_t, bq_r, wk_m, bk_c, wv_t, bv_r)

    # -------- Kernel 2: flash attention + proj_out + residual, tiled --------
    TQ, TK = _pick_attn_tiles(N, small_tiles)
    nq, nk = N // TQ, N // TK
    c2 = lambda shape: _const_spec(shape, lambda b, qi, ki: (0, 0), single_buffer)

    k2_bufs = (2 * TQ * C * 2 + 2 * C * TK * 2 + 2 * TK * C * 2    # q, k, v
               + 2 * C * TQ * 4 + 2 * C * TQ * 4                   # residual x, out
               + (1 if single_buffer else 2) * (C * C * 2 + C * 4)  # wp, bp
               + TQ * C * 4 + 2 * TQ * 4                           # scratch acc, m, l
               + 2 * TQ * TK * 4)                                  # s / p temporaries

    y_cn = pl.pallas_call(
        _attn_proj_kernel,
        out_shape=jax.ShapeDtypeStruct((B, C, N), jnp.float32),
        grid_spec=pltpu.PrefetchScalarGridSpec(
            num_scalar_prefetch=0,
            grid=(B, nq, nk),                        # KV (reduction) axis last
            in_specs=[
                pl.BlockSpec((1, TQ, C), lambda b, qi, ki: (b, qi, 0)),   # q
                pl.BlockSpec((1, C, TK), lambda b, qi, ki: (b, 0, ki)),   # k
                pl.BlockSpec((1, TK, C), lambda b, qi, ki: (b, ki, 0)),   # v
                pl.BlockSpec((1, C, TQ), lambda b, qi, ki: (b, 0, qi)),   # residual x
                c2((C, C)), c2((C, 1)),                                   # wp, bp
            ],
            out_specs=pl.BlockSpec((1, C, TQ), lambda b, qi, ki: (b, 0, qi)),
            scratch_shapes=[
                pltpu.VMEM((TQ, 1), jnp.float32),    # running max
                pltpu.VMEM((TQ, 1), jnp.float32),    # running softmax denom
                pltpu.VMEM((TQ, C), jnp.float32),    # output accumulator
            ],
        ),
        compiler_params=pltpu.CompilerParams(
            dimension_semantics=("parallel", "parallel", "arbitrary"),
            vmem_limit_bytes=_vmem_limit(k2_bufs)),
    )(q_tok, k_cm, v_tok, x_cn, wp_m, bp_c)

    # (B, C, N) -> NCHW is a free reshape.
    return y_cn.reshape(B, C, H, W)


# ---------------------------------------------------------------------------
# Pure-JAX reference mirroring the PyTorch forward (mask=None)
# ---------------------------------------------------------------------------
def attn_block_reference(x, params):
    B, C, H, W = x.shape
    N = H * W
    G = NUM_GROUPS
    xr = x.reshape(B, G, C // G, H, W)
    mean = xr.mean(axis=(2, 3, 4), keepdims=True)
    var = xr.var(axis=(2, 3, 4), keepdims=True)
    hn = ((xr - mean) / jnp.sqrt(var + EPS)).reshape(B, C, H, W)
    hn = hn * params["gamma"].reshape(1, C, 1, 1) + params["beta"].reshape(1, C, 1, 1)

    def conv1x1(h, w, b):
        return jnp.einsum("oc,bchw->bohw", w.reshape(C, C), h) + b.reshape(1, C, 1, 1)

    q = conv1x1(hn, params["wq"], params["bq"]).reshape(B, C, N).transpose(0, 2, 1)
    k = conv1x1(hn, params["wk"], params["bk"]).reshape(B, C, N)
    v = conv1x1(hn, params["wv"], params["bv"]).reshape(B, C, N)
    w_ = jnp.einsum("bic,bcj->bij", q, k) * (C ** -0.5)
    w_ = jax.nn.softmax(w_, axis=2)
    h_ = jnp.einsum("bcj,bij->bci", v, w_).reshape(B, C, H, W)
    h_ = conv1x1(h_, params["wp"], params["bp"])
    return x + h_


if __name__ == "__main__":
    # Small demo shapes: C must be a multiple of 32 (GroupNorm); H*W = 256 so the
    # attention grid is (B, 2, 2) and the online-softmax / KV-tiling path is
    # actually exercised.
    B, C, H, W = 2, 64, 16, 16
    key = jax.random.PRNGKey(0)
    keys = jax.random.split(key, 11)

    x = jax.random.normal(keys[0], (B, C, H, W), dtype=jnp.float32)
    params = {
        "gamma": 1.0 + 0.1 * jax.random.normal(keys[1], (C,), jnp.float32),
        "beta": 0.1 * jax.random.normal(keys[2], (C,), jnp.float32),
        "wq": 0.05 * jax.random.normal(keys[3], (C, C, 1, 1), jnp.float32),
        "bq": 0.05 * jax.random.normal(keys[4], (C,), jnp.float32),
        "wk": 0.05 * jax.random.normal(keys[5], (C, C, 1, 1), jnp.float32),
        "bk": 0.05 * jax.random.normal(keys[6], (C,), jnp.float32),
        "wv": 0.05 * jax.random.normal(keys[7], (C, C, 1, 1), jnp.float32),
        "bv": 0.05 * jax.random.normal(keys[8], (C,), jnp.float32),
        "wp": 0.05 * jax.random.normal(keys[9], (C, C, 1, 1), jnp.float32),
        "bp": 0.05 * jax.random.normal(keys[10], (C,), jnp.float32),
    }

    y = attn_block(x, params)
    jax.block_until_ready(y)

    y_ref = attn_block_reference(x, params)
    assert y.shape == x.shape
    # bf16 matmul operands (f32 accumulation, f32 softmax) + approx reciprocal
    # => relaxed tolerance versus the all-f32 reference.
    np.testing.assert_allclose(np.asarray(y), np.asarray(y_ref),
                               rtol=2e-2, atol=2e-2)
    print("KERNEL_OK")
</pallas_src>

<mosaic_0001>
module attributes {stable_mosaic.version = 11 : i64} {
  func.func @_probe_kernel(%arg0: i32, %arg1: memref<8x128xf32, #tpu.memory_space<vmem>>, %arg2: memref<8x128xf32, #tpu.memory_space<vmem>>, %arg3: memref<8x128xf32, #tpu.memory_space<vmem>>) attributes {dimension_semantics = [#tpu.dimension_semantics<arbitrary>], iteration_bounds = array<i64: 2>, scalar_prefetch = 0 : i64, scratch_operands = 0 : i64, tpu.core_type = #tpu.core_type<tc>, window_params = [{pipeline_mode = #tpu.pipeline_mode<synchronous>, transform_indices = @transform_0, window_bounds = array<i64: 8, 128>}, {pipeline_mode = #tpu.pipeline_mode<synchronous>, transform_indices = @transform_1, window_bounds = array<i64: 8, 128>}, {pipeline_mode = #tpu.pipeline_mode<synchronous>, transform_indices = @transform_2, window_bounds = array<i64: 8, 128>}]} {
    %c0 = arith.constant 0 : index
    %c0_0 = arith.constant 0 : index
    %0 = vector.load %arg2[%c0, %c0_0] : memref<8x128xf32, #tpu.memory_space<vmem>>, vector<8x128xf32>
    %c0_1 = arith.constant 0 : index
    %c0_2 = arith.constant 0 : index
    %1 = vector.load %arg1[%c0_1, %c0_2] : memref<8x128xf32, #tpu.memory_space<vmem>>, vector<8x128xf32>
    %2 = arith.addf %0, %1 : vector<8x128xf32>
    %c0_3 = arith.constant 0 : index
    %c0_4 = arith.constant 0 : index
    %3 = vector.load %arg3[%c0_3, %c0_4] : memref<8x128xf32, #tpu.memory_space<vmem>>, vector<8x128xf32>
    tpu.vector_store %arg3[%c0_3, %c0_4], %2 {strides = array<i32>} : memref<8x128xf32, #tpu.memory_space<vmem>>, vector<8x128xf32>,
    return
  }
  func.func @transform_0(%arg0: i32) -> (i32, i32) {
    %c0_i32 = arith.constant 0 : i32
    %c0_i32_0 = arith.constant 0 : i32
    %c0_i32_1 = arith.constant 0 : i32
    return %c0_i32, %c0_i32_0 : i32, i32
  }
  func.func @transform_1(%arg0: i32) -> (i32, i32) {
    %c0_i32 = arith.constant 0 : i32
    %c0_i32_0 = arith.constant 0 : i32
    %c0_i32_1 = arith.constant 0 : i32
    return %c0_i32, %c0_i32_0 : i32, i32
  }
  func.func @transform_2(%arg0: i32) -> (i32, i32) {
    %c0_i32 = arith.constant 0 : i32
    %c0_i32_0 = arith.constant 0 : i32
    %c0_i32_1 = arith.constant 0 : i32
    return %c0_i32, %c0_i32_0 : i32, i32
  }
}

module attributes {stable_mosaic.version = 11 : i64} {
  func.func @_norm_qkv_kernel(%arg0: i32, %arg1: i32, %arg2: memref<1x64x256xf32, #tpu.memory_space<vmem>>, %arg3: memref<1x64x1xf32, #tpu.memory_space<vmem>>, %arg4: memref<1x64x1xf32, #tpu.memory_space<vmem>>, %arg5: memref<64x64xbf16, #tpu.memory_space<vmem>>, %arg6: memref<1x64xf32, #tpu.memory_space<vmem>>, %arg7: memref<64x64xbf16, #tpu.memory_space<vmem>>, %arg8: memref<64x1xf32, #tpu.memory_space<vmem>>, %arg9: memref<64x64xbf16, #tpu.memory_space<vmem>>, %arg10: memref<1x64xf32, #tpu.memory_space<vmem>>, %arg11: memref<1x256x64xbf16, #tpu.memory_space<vmem>>, %arg12: memref<1x64x256xbf16, #tpu.memory_space<vmem>>, %arg13: memref<1x256x64xbf16, #tpu.memory_space<vmem>>) attributes {dimension_semantics = [#tpu.dimension_semantics<parallel>, #tpu.dimension_semantics<parallel>], iteration_bounds = array<i64: 2, 1>, scalar_prefetch = 0 : i64, scratch_operands = 0 : i64, tpu.core_type = #tpu.core_type<tc>, window_params = [{transform_indices = @transform_0, window_bounds = array<i64: 1, 64, 256>}, {transform_indices = @transform_1, window_bounds = array<i64: 1, 64, 1>}, {transform_indices = @transform_2, window_bounds = array<i64: 1, 64, 1>}, {pipeline_mode = #tpu.pipeline_mode<synchronous>, transform_indices = @transform_3, window_bounds = array<i64: 64, 64>}, {pipeline_mode = #tpu.pipeline_mode<synchronous>, transform_indices = @transform_4, window_bounds = array<i64: 1, 64>}, {pipeline_mode = #tpu.pipeline_mode<synchronous>, transform_indices = @transform_5, window_bounds = array<i64: 64, 64>}, {pipeline_mode = #tpu.pipeline_mode<synchronous>, transform_indices = @transform_6, window_bounds = array<i64: 64, 1>}, {pipeline_mode = #tpu.pipeline_mode<synchronous>, transform_indices = @transform_7, window_bounds = array<i64: 64, 64>}, {pipeline_mode = #tpu.pipeline_mode<synchronous>, transform_indices = @transform_8, window_bounds = array<i64: 1, 64>}, {transform_indices = @transform_9, window_bounds = array<i64: 1, 256, 64>}, {transform_indices = @transform_10, window_bounds = array<i64: 1, 64, 256>}, {transform_indices = @transform_11, window_bounds = array<i64: 1, 256, 64>}]} {
    %c0 = arith.constant 0 : index
    %c0_0 = arith.constant 0 : index
    %c0_1 = arith.constant 0 : index
    %0 = vector.load %arg2[%c0, %c0_0, %c0_1] : memref<1x64x256xf32, #tpu.memory_space<vmem>>, vector<1x64x256xf32>
    %1 = vector.shape_cast %0 : vector<1x64x256xf32> to vector<64x256xf32>
    %c0_2 = arith.constant 0 : index
    %c0_3 = arith.constant 0 : index
    %c0_4 = arith.constant 0 : index
    %2 = vector.load %arg3[%c0_2, %c0_3, %c0_4] : memref<1x64x1xf32, #tpu.memory_space<vmem>>, vector<1x64x1xf32>
    %3 = vector.shape_cast %2 : vector<1x64x1xf32> to vector<64x1xf32>
    %4 = vector.broadcast %3 : vector<64x1xf32> to vector<64x256xf32>
    %5 = arith.mulf %1, %4 : vector<64x256xf32>
    %c0_5 = arith.constant 0 : index
    %c0_6 = arith.constant 0 : index
    %c0_7 = arith.constant 0 : index
    %6 = vector.load %arg4[%c0_5, %c0_6, %c0_7] : memref<1x64x1xf32, #tpu.memory_space<vmem>>, vector<1x64x1xf32>
    %7 = vector.shape_cast %6 : vector<1x64x1xf32> to vector<64x1xf32>
    %8 = vector.broadcast %7 : vector<64x1xf32> to vector<64x256xf32>
    %9 = arith.addf %5, %8 : vector<64x256xf32>
    %10 = arith.truncf %9 : vector<64x256xf32> to vector<64x256xbf16>
    %c0_8 = arith.constant 0 : index
    %c0_9 = arith.constant 0 : index
    %11 = vector.load %arg7[%c0_8, %c0_9] : memref<64x64xbf16, #tpu.memory_space<vmem>>, vector<64x64xbf16>
    %cst = arith.constant dense<0.000000e+00> : vector<64x256xf32>
    %12 = tpu.matmul %11, %10, %cst {dimension_numbers = #tpu.dot_dimension_numbers<[1], [0], [0], [1], [0, 0, 1, 1], [], []>} : vector<64x64xbf16>, vector<64x256xbf16>, vector<64x256xf32> -> vector<64x256xf32>
    %c0_10 = arith.constant 0 : index
    %c0_11 = arith.constant 0 : index
    %13 = vector.load %arg8[%c0_10, %c0_11] : memref<64x1xf32, #tpu.memory_space<vmem>>, vector<64x1xf32>
    %14 = vector.broadcast %13 : vector<64x1xf32> to vector<64x256xf32>
    %15 = arith.addf %12, %14 : vector<64x256xf32>
    %16 = arith.truncf %15 : vector<64x256xf32> to vector<64x256xbf16>
    %c0_12 = arith.constant 0 : index
    %c0_13 = arith.constant 0 : index
    %c0_14 = arith.constant 0 : index
    %17 = vector.load %arg12[%c0_12, %c0_13, %c0_14] : memref<1x64x256xbf16, #tpu.memory_space<vmem>>, vector<1x64x256xbf16>
    %18 = vector.shape_cast %17 : vector<1x64x256xbf16> to vector<64x256xbf16>
    %19 = vector.shape_cast %16 : vector<64x256xbf16> to vector<1x64x256xbf16>
    tpu.vector_store %arg12[%c0_12, %c0_13, %c0_14], %19 {strides = array<i32>} : memref<1x64x256xbf16, #tpu.memory_space<vmem>>, vector<1x64x256xbf16>,
    %20 = tpu.transpose %10, [1, 0] : vector<64x256xbf16> -> vector<256x64xbf16>
    %c0_15 = arith.constant 0 : index
    %c0_16 = arith.constant 0 : index
    %21 = vector.load %arg5[%c0_15, %c0_16] : memref<64x64xbf16, #tpu.memory_space<vmem>>, vector<64x64xbf16>
    %cst_17 = arith.constant dense<0.000000e+00> : vector<256x64xf32>
    %22 = tpu.matmul %20, %21, %cst_17 {dimension_numbers = #tpu.dot_dimension_numbers<[1], [0], [0], [1], [0, 0, 1, 1], [], []>} : vector<256x64xbf16>, vector<64x64xbf16>, vector<256x64xf32> -> vector<256x64xf32>
    %c0_18 = arith.constant 0 : index
    %c0_19 = arith.constant 0 : index
    %23 = vector.load %arg6[%c0_18, %c0_19] : memref<1x64xf32, #tpu.memory_space<vmem>>, vector<1x64xf32>
    %24 = vector.broadcast %23 : vector<1x64xf32> to vector<256x64xf32>
    %25 = arith.addf %22, %24 : vector<256x64xf32>
    %26 = arith.truncf %25 : vector<256x64xf32> to vector<256x64xbf16>
    %c0_20 = arith.constant 0 : index
    %c0_21 = arith.constant 0 : index
    %c0_22 = arith.constant 0 : index
    %27 = vector.load %arg11[%c0_20, %c0_21, %c0_22] : memref<1x256x64xbf16, #tpu.memory_space<vmem>>, vector<1x256x64xbf16>
    %28 = vector.shape_cast %27 : vector<1x256x64xbf16> to vector<256x64xbf16>
    %29 = vector.shape_cast %26 : vector<256x64xbf16> to vector<1x256x64xbf16>
    tpu.vector_store %arg11[%c0_20, %c0_21, %c0_22], %29 {strides = array<i32>} : memref<1x256x64xbf16, #tpu.memory_space<vmem>>, vector<1x256x64xbf16>,
    %c0_23 = arith.constant 0 : index
    %c0_24 = arith.constant 0 : index
    %30 = vector.load %arg9[%c0_23, %c0_24] : memref<64x64xbf16, #tpu.memory_space<vmem>>, vector<64x64xbf16>
    %cst_25 = arith.constant dense<0.000000e+00> : vector<256x64xf32>
    %31 = tpu.matmul %20, %30, %cst_25 {dimension_numbers = #tpu.dot_dimension_numbers<[1], [0], [0], [1], [0, 0, 1, 1], [], []>} : vector<256x64xbf16>, vector<64x64xbf16>, vector<256x64xf32> -> vector<256x64xf32>
    %c0_26 = arith.constant 0 : index
    %c0_27 = arith.constant 0 : index
    %32 = vector.load %arg10[%c0_26, %c0_27] : memref<1x64xf32, #tpu.memory_space<vmem>>, vector<1x64xf32>
    %33 = vector.broadcast %32 : vector<1x64xf32> to vector<256x64xf32>
    %34 = arith.addf %31, %33 : vector<256x64xf32>
    %35 = arith.truncf %34 : vector<256x64xf32> to vector<256x64xbf16>
    %c0_28 = arith.constant 0 : index
    %c0_29 = arith.constant 0 : index
    %c0_30 = arith.constant 0 : index
    %36 = vector.load %arg13[%c0_28, %c0_29, %c0_30] : memref<1x256x64xbf16, #tpu.memory_space<vmem>>, vector<1x256x64xbf16>
    %37 = vector.shape_cast %36 : vector<1x256x64xbf16> to vector<256x64xbf16>
    %38 = vector.shape_cast %35 : vector<256x64xbf16> to vector<1x256x64xbf16>
    tpu.vector_store %arg13[%c0_28, %c0_29, %c0_30], %38 {strides = array<i32>} : memref<1x256x64xbf16, #tpu.memory_space<vmem>>, vector<1x256x64xbf16>,
    return
  }
  func.func @transform_0(%arg0: i32, %arg1: i32) -> (i32, i32, i32) {
    %c0_i32 = arith.constant 0 : i32
    %c0_i32_0 = arith.constant 0 : i32
    return %arg0, %c0_i32, %arg1 : i32, i32, i32
  }
  func.func @transform_1(%arg0: i32, %arg1: i32) -> (i32, i32, i32) {
    %c0_i32 = arith.constant 0 : i32
    %c0_i32_0 = arith.constant 0 : i32
    %c0_i32_1 = arith.constant 0 : i32
    return %arg0, %c0_i32, %c0_i32_0 : i32, i32, i32
  }
  func.func @transform_2(%arg0: i32, %arg1: i32) -> (i32, i32, i32) {
    %c0_i32 = arith.constant 0 : i32
    %c0_i32_0 = arith.constant 0 : i32
    %c0_i32_1 = arith.constant 0 : i32
    return %arg0, %c0_i32, %c0_i32_0 : i32, i32, i32
  }
  func.func @transform_3(%arg0: i32, %arg1: i32) -> (i32, i32) {
    %c0_i32 = arith.constant 0 : i32
    %c0_i32_0 = arith.constant 0 : i32
    %c0_i32_1 = arith.constant 0 : i32
    return %c0_i32, %c0_i32_0 : i32, i32
  }
  func.func @transform_4(%arg0: i32, %arg1: i32) -> (i32, i32) {
    %c0_i32 = arith.constant 0 : i32
    %c0_i32_0 = arith.constant 0 : i32
    %c0_i32_1 = arith.constant 0 : i32
    return %c0_i32, %c0_i32_0 : i32, i32
  }
  func.func @transform_5(%arg0: i32, %arg1: i32) -> (i32, i32) {
    %c0_i32 = arith.constant 0 : i32
    %c0_i32_0 = arith.constant 0 : i32
    %c0_i32_1 = arith.constant 0 : i32
    return %c0_i32, %c0_i32_0 : i32, i32
  }
  func.func @transform_6(%arg0: i32, %arg1: i32) -> (i32, i32) {
    %c0_i32 = arith.constant 0 : i32
    %c0_i32_0 = arith.constant 0 : i32
    %c0_i32_1 = arith.constant 0 : i32
    return %c0_i32, %c0_i32_0 : i32, i32
  }
  func.func @transform_7(%arg0: i32, %arg1: i32) -> (i32, i32) {
    %c0_i32 = arith.constant 0 : i32
    %c0_i32_0 = arith.constant 0 : i32
    %c0_i32_1 = arith.constant 0 : i32
    return %c0_i32, %c0_i32_0 : i32, i32
  }
  func.func @transform_8(%arg0: i32, %arg1: i32) -> (i32, i32) {
    %c0_i32 = arith.constant 0 : i32
    %c0_i32_0 = arith.constant 0 : i32
    %c0_i32_1 = arith.constant 0 : i32
    return %c0_i32, %c0_i32_0 : i32, i32
  }
  func.func @transform_9(%arg0: i32, %arg1: i32) -> (i32, i32, i32) {
    %c0_i32 = arith.constant 0 : i32
    %c0_i32_0 = arith.constant 0 : i32
    return %arg0, %arg1, %c0_i32 : i32, i32, i32
  }
  func.func @transform_10(%arg0: i32, %arg1: i32) -> (i32, i32, i32) {
    %c0_i32 = arith.constant 0 : i32
    %c0_i32_0 = arith.constant 0 : i32
    return %arg0, %c0_i32, %arg1 : i32, i32, i32
  }
  func.func @transform_11(%arg0: i32, %arg1: i32) -> (i32, i32, i32) {
    %c0_i32 = arith.constant 0 : i32
    %c0_i32_0 = arith.constant 0 : i32
    return %arg0, %arg1, %c0_i32 : i32, i32, i32
  }
}

</mosaic_0001>

<llo_original>
// kernel: tpu_custom_call.1
$region0: #{tpu_custom_call.1}
  #allocation0 [shape = 'u32[]', space=smem, size = 0x4, offset = 0x4, fixed_abs, tag = 'smem constant byte address 0x4 - core index']
  #allocation1 [shape = 'u32[144,128]{1,0:T(1,128)}', space=vmem, size = 0x12000, scoped, tag = 'internal scratch']
  %s0 = inlined_call_operand.hbm [shape: f32[8,128], index: 0, kind: input, shape index: {}]
  %s1 = inlined_call_operand.hbm [shape: f32[8,128], index: 1, kind: input, shape index: {}]
  %s2 = inlined_call_operand.hbm [shape: f32[8,128], index: 2, kind: output, shape index: {}]
  %s3 = sld [smem:[#allocation0]]
  $region49: #{tpu_custom_call.1} parent=0
    _
  %s5 = ssub.s32 1, %s3
  %s6 = scalar_select 0, %s5, %s3
  $region1: #{tpu_custom_call.1} parent=0
    #allocation2 [shape = 'u8[4096]{0}', space=vmem, size = 0x1000, scoped, tag = 'input window, operand 0, single buffered']
    #allocation3 [shape = 's32[2]{0}', space=sflag, size = 0x8, scoped, tag = 'scoped memory for tpu_custom_call.1']
    #allocation4 [shape = 's32[2]{0}', space=sflag, size = 0x8, scoped, tag = 'scoped memory for tpu_custom_call.1']
    #allocation5 [shape = 'u8[4096]{0}', space=vmem, size = 0x1000, scoped, tag = 'input window, operand 1, single buffered']
    #allocation6 [shape = 's32[1]{0}', space=sflag, size = 0x4, scoped, tag = 'scoped memory for tpu_custom_call.1']
    #allocation7 [shape = 'u8[4096]{0}', space=vmem, size = 0x1000, scoped, tag = 'output window, operand 0, single buffered']
    %7 = vsyncpa [#allocation3], 0
    %8 = vsyncpa [#allocation6], 0
    %9 = vsyncpa [#allocation4], 0
    loop: start=0, step=1, limit=4
    $region2: #{tpu_custom_call.1} parent=1 // loop_pre_header
      _
    $region3: #{tpu_custom_call.1} parent=1 // loop_header
      %s11 = sphi 0, %s15
      %p12 = scmp.ge.s32.totalorder %s11, 4
      %s19 = sphi 0, %s19
      %s21 = sphi 0, %s19
      %s22 = sphi 0, %s21
      %s36 = sphi 0, %s22
      %s40 = sphi 0, %s40
      %s42 = sphi 0, %s40
      %s43 = sphi 0, %s42
      %s57 = sphi 0, %s43
      %s61 = sphi 0, %s61
      %s63 = sphi 0, %s61
      %s64 = sphi 0, %s63
      %s78 = sphi 0, %s64
    $region4: #{tpu_custom_call.1} parent=1 // loop_header_branch
      %14 = sbr.rel (%p12) target = $region8
    $region5: #{tpu_custom_call.1} parent=1 // loop_body
      %s16 = ssub.s32 %s11, 1
      %s17 = ssub.s32 %s11, 2
      %s18 = sadd.s32 %s11, 1
      %s20 = sadd.s32 %s19, 1
      %p23 = scmp.eq.s32.totalorder %s11, 1
      %p24 = scmp.ne.s32.totalorder %s19, %s21
      %p25 = scmp.eq.s32.totalorder %s11, 0
      %p26 = por %p24, %p25
      %p27 = scmp.ne.s32.totalorder %s19, %s21
      %p28 = scmp.eq.s32.totalorder %s16, 1
      %p29 = por %p27, %p28
      %p30 = scmp.ne.s32.totalorder %s21, %s22
      %p31 = scmp.eq.s32.totalorder %s16, 0
      %p32 = por %p30, %p31
      %p33 = scmp.ne.s32.totalorder %s21, %s22
      %p34 = scmp.eq.s32.totalorder %s17, 1
      %p35 = por %p33, %p34
      %p37 = scmp.ne.s32.totalorder %s22, %s36
      %p38 = scmp.eq.s32.totalorder %s17, 0
      %p39 = por %p37, %p38
      %s41 = sadd.s32 %s40, 1
      %p44 = scmp.eq.s32.totalorder %s11, 1
      %p45 = scmp.ne.s32.totalorder %s40, %s42
      %p46 = scmp.eq.s32.totalorder %s11, 0
      %p47 = por %p45, %p46
      %p48 = scmp.ne.s32.totalorder %s40, %s42
      %p49 = scmp.eq.s32.totalorder %s16, 1
      %p50 = por %p48, %p49
      %p51 = scmp.ne.s32.totalorder %s42, %s43
      %p52 = scmp.eq.s32.totalorder %s16, 0
      %p53 = por %p51, %p52
      %p54 = scmp.ne.s32.totalorder %s42, %s43
      %p55 = scmp.eq.s32.totalorder %s17, 1
      %p56 = por %p54, %p55
      %p58 = scmp.ne.s32.totalorder %s43, %s57
      %p59 = scmp.eq.s32.totalorder %s17, 0
      %p60 = por %p58, %p59
      %s62 = sadd.s32 %s61, 1
      %p65 = scmp.eq.s32.totalorder %s11, 1
      %p66 = scmp.ne.s32.totalorder %s61, %s63
      %p67 = scmp.eq.s32.totalorder %s11, 0
      %p68 = por %p66, %p67
      %p69 = scmp.ne.s32.totalorder %s61, %s63
      %p70 = scmp.eq.s32.totalorder %s16, 1
      %p71 = por %p69, %p70
      %p72 = scmp.ne.s32.totalorder %s63, %s64
      %p73 = scmp.eq.s32.totalorder %s16, 0
      %p74 = por %p72, %p73
      %p75 = scmp.ne.s32.totalorder %s63, %s64
      %p76 = scmp.eq.s32.totalorder %s17, 1
      %p77 = por %p75, %p76
      %p79 = scmp.ne.s32.totalorder %s64, %s78
      %p80 = scmp.eq.s32.totalorder %s17, 0
      %p81 = por %p79, %p80
      %p82 = scmp.le.s32.totalorder 1, %s11
      %p83 = scmp.lt.s32.totalorder %s11, 3
      %p84 = pnand %p82, %p83
      %p85 = pneg %p84
      // Predicated region
      $region9: #{tpu_custom_call.1} parent=5 // pred_check
        _
      $region10: #{tpu_custom_call.1} parent=5 // pred_check_branch
        %87 = sbr.rel (%p84) target = $region12
      $region11: #{tpu_custom_call.1} parent=5 // pred_region
        %s88 = ssub.s32 %s11, 1
        // Predicated region
        $region13: #{tpu_custom_call.1} parent=11 // pred_check
          %p89 = pneg %p32
        $region14: #{tpu_custom_call.1} parent=11 // pred_check_branch
          %91 = sbr.rel (%p89) target = $region16
        $region15: #{tpu_custom_call.1} parent=11 // pred_region
          %s93 = ssub.s32 128, 128
          %94 = vsyncadd [#allocation3], %s93
          %s96 = sshll.u32 [#allocation2], 4
          %s97 = int_to_ptr.vmem [resolvable:$true] %s96
          %99 = dma.hbm_to_vmem [thread:$0]  %s0, 128, %s97, [#allocation3]
        $region16: #{tpu_custom_call.1} parent=11 // pred_fallthru
          _
        // Predicated region
        $region17: #{tpu_custom_call.1} parent=11 // pred_check
          %p100 = pneg %p53
        $region18: #{tpu_custom_call.1} parent=11 // pred_check_branch
          %102 = sbr.rel (%p100) target = $region20
        $region19: #{tpu_custom_call.1} parent=11 // pred_region
          %s104 = ssub.s32 128, 128
          %105 = vsyncadd [#allocation6], %s104
          %s107 = sshll.u32 [#allocation5], 4
          %s108 = int_to_ptr.vmem [resolvable:$true] %s107
          %110 = dma.hbm_to_vmem [thread:$0]  %s1, 128, %s108, [#allocation6]
        $region20: #{tpu_custom_call.1} parent=11 // pred_fallthru
          _
      $region12: #{tpu_custom_call.1} parent=5 // pred_fallthru
        _
      %p111 = scmp.lt.s32.totalorder %s11, 2
      // Predicated region
      $region21: #{tpu_custom_call.1} parent=5 // pred_check
        %p112 = pneg %p111
      $region22: #{tpu_custom_call.1} parent=5 // pred_check_branch
        %114 = sbr.rel (%p112) target = $region24
      $region23: #{tpu_custom_call.1} parent=5 // pred_region
        _
      $region24: #{tpu_custom_call.1} parent=5 // pred_fallthru
        _
      %p115 = scmp.le.s32.totalorder 1, %s11
      %p116 = scmp.lt.s32.totalorder %s11, 3
      %p117 = pnand %p115, %p116
      %p118 = pneg %p117
      // Predicated region
      $region25: #{tpu_custom_call.1} parent=5 // pred_check
        _
      $region26: #{tpu_custom_call.1} parent=5 // pred_check_branch
        %120 = sbr.rel (%p117) target = $region28
      $region27: #{tpu_custom_call.1} parent=5 // pred_region
        %s121 = ssub.s32 %s11, 1
        // Predicated region
        $region29: #{tpu_custom_call.1} parent=27 // pred_check
          %p122 = pneg %p32
        $region30: #{tpu_custom_call.1} parent=27 // pred_check_branch
          %124 = sbr.rel (%p122) target = $region32
        $region31: #{tpu_custom_call.1} parent=27 // pred_region
          %125 = dma.done [#allocation3], 128
        $region32: #{tpu_custom_call.1} parent=27 // pred_fallthru
          _
        // Predicated region
        $region33: #{tpu_custom_call.1} parent=27 // pred_check
          %p126 = pneg %p53
        $region34: #{tpu_custom_call.1} parent=27 // pred_check_branch
          %128 = sbr.rel (%p126) target = $region36
        $region35: #{tpu_custom_call.1} parent=27 // pred_region
          %129 = dma.done [#allocation6], 128
        $region36: #{tpu_custom_call.1} parent=27 // pred_fallthru
          _
        %p130 = pneg %p32
        %p131 = pneg %p29
        %p132 = pneg %p53
        %p133 = pneg %p50
        %p134 = pneg %p74
        %p135 = pneg %p71
        %v136 = vld [vmem:[#allocation5] sm:$0xff]
        %v137 = vld [vmem:[#allocation2] sm:$0xff]
        %v138 = vadd.f32 %v136, %v137
        %139 = vst [vmem:[#allocation7] sm:$0xff] %v138
        // Predicated region
        $region37: #{tpu_custom_call.1} parent=27 // pred_check
          %p140 = pneg %p71
        $region38: #{tpu_custom_call.1} parent=27 // pred_check_branch
          %142 = sbr.rel (%p140) target = $region40
        $region39: #{tpu_custom_call.1} parent=27 // pred_region
          %s144 = ssub.s32 128, 128
          %145 = vsyncadd [#allocation4], %s144
          %s147 = sshll.u32 [#allocation7], 4
          %s148 = int_to_ptr.vmem [resolvable:$true] %s147
          %150 = dma.vmem_to_hbm [thread:$0]  %s148, 128, %s2, [#allocation4]
        $region40: #{tpu_custom_call.1} parent=27 // pred_fallthru
          _
        // Predicated region
        $region41: #{tpu_custom_call.1} parent=27 // pred_check
          %p151 = pneg %p71
        $region42: #{tpu_custom_call.1} parent=27 // pred_check_branch
          %153 = sbr.rel (%p151) target = $region44
        $region43: #{tpu_custom_call.1} parent=27 // pred_region
          %154 = dma.done [#allocation4], 128
        $region44: #{tpu_custom_call.1} parent=27 // pred_fallthru
          _
      $region28: #{tpu_custom_call.1} parent=5 // pred_fallthru
        _
      %p155 = scmp.le.s32.totalorder 2, %s11
      // Predicated region
      $region45: #{tpu_custom_call.1} parent=5 // pred_check
        %p156 = pneg %p155
      $region46: #{tpu_custom_call.1} parent=5 // pred_check_branch
        %158 = sbr.rel (%p156) target = $region48
      $region47: #{tpu_custom_call.1} parent=5 // pred_region
        %s159 = ssub.s32 %s11, 2
      $region48: #{tpu_custom_call.1} parent=5 // pred_fallthru
        _
    $region6: #{tpu_custom_call.1} parent=1 // loop_footer
      %s15 = sadd.s32 1, %s11
    $region7: #{tpu_custom_call.1} parent=1 // loop_footer_branch
      %10 = sbr.rel target = $region3
    $region8: #{tpu_custom_call.1} parent=1 // loop_exit
      _
    %160 = vsyncpa [#allocation3], 1
    %s161 = scalar_lea.sflag [#allocation3], 1
    %162 = vsyncpa %s161, 1
    %163 = vsyncpa [#allocation6], 1
    %164 = vsyncpa [#allocation4], 1
    %s165 = scalar_lea.sflag [#allocation4], 1
    %166 = vsyncpa %s165, 1

// kernel: tpu_custom_call.1
$region0: #{tpu_custom_call.1}
  #allocation0 [shape = 'u32[]', space=smem, size = 0x4, offset = 0x4, fixed_abs, tag = 'smem constant byte address 0x4 - core index']
  #allocation1 [shape = 'u32[144,128]{1,0:T(1,128)}', space=vmem, size = 0x12000, scoped, tag = 'internal scratch']
  %s0 = inlined_call_operand.vmem [shape: f32[2,64,256], index: 0, kind: input, shape index: {}]
  %s1 = inlined_call_operand.vmem [shape: f32[2,64,1], index: 1, kind: input, shape index: {}]
  %s2 = inlined_call_operand.vmem [shape: f32[2,64,1], index: 2, kind: input, shape index: {}]
  %s3 = inlined_call_operand.vmem [shape: bf16[64,64], index: 3, kind: input, shape index: {}]
  %s4 = inlined_call_operand.vmem [shape: f32[1,64], index: 4, kind: input, shape index: {}]
  %s5 = inlined_call_operand.vmem [shape: bf16[64,64], index: 5, kind: input, shape index: {}]
  %s6 = inlined_call_operand.vmem [shape: f32[64,1], index: 6, kind: input, shape index: {}]
  %s7 = inlined_call_operand.hbm [shape: bf16[64,64], index: 7, kind: input, shape index: {}]
  %s8 = inlined_call_operand.vmem [shape: f32[1,64], index: 8, kind: input, shape index: {}]
  %s9 = inlined_call_operand.vmem [shape: bf16[2,256,64], index: 9, kind: output, shape index: {0}]
  %s10 = inlined_call_operand.hbm [shape: bf16[2,64,256], index: 10, kind: output, shape index: {1}]
  %s11 = inlined_call_operand.vmem [shape: bf16[2,256,64], index: 11, kind: output, shape index: {2}]
  %12 = xla_tuple %s9, %s10, %s11
  %s13 = sld [smem:[#allocation0]]
  $region89: #{tpu_custom_call.1} parent=0
    _
  %s15 = ssub.s32 1, %s13
  %s16 = scalar_select 0, %s15, %s13
  $region1: #{tpu_custom_call.1} parent=0
    #allocation2 [shape = 'u8[16384]{0}', space=vmem, size = 0x4000, scoped, tag = 'input window, operand 7, single buffered']
    #allocation3 [shape = 's32[2]{0}', space=sflag, size = 0x8, scoped, tag = 'scoped memory for tpu_custom_call.1']
    #allocation4 [shape = 's32[2]{0}', space=sflag, size = 0x8, scoped, tag = 'scoped memory for tpu_custom_call.1']
    #allocation5 [shape = 'u8[65536]{0}', space=vmem, size = 0x10000, scoped, tag = 'output window, operand 1']
    %17 = vsyncpa [#allocation3], 0
    %18 = vsyncpa [#allocation4], 0
    %s19 = scalar_lea.sflag [#allocation4], 1
    %20 = vsyncpa %s19, 0
    loop: start=0, step=1, limit=4
    $region2: #{tpu_custom_call.1} parent=1 // loop_pre_header
      _
    $region3: #{tpu_custom_call.1} parent=1 // loop_header
      %s22 = sphi 0, %s26
      %p23 = scmp.ge.s32.totalorder %s22, 4
      %s29 = sphi 0, %s41
      %s30 = sphi 0, %s37
      %s31 = sphi 0, %s29
      %s32 = sphi 0, %s30
      %s33 = sphi 0, %s31
      %s34 = sphi 0, %s32
      %s46 = sphi 0, %s48
      %s49 = sphi 0, %s46
      %s50 = sphi 0, %s49
      %s66 = sphi 0, %s50
      %s72 = sphi 0, %s74
      %s75 = sphi 0, %s72
      %s76 = sphi 0, %s75
      %s92 = sphi 0, %s76
      %s98 = sphi 0, %s100
      %s101 = sphi 0, %s98
      %s102 = sphi 0, %s101
      %s118 = sphi 0, %s102
      %s122 = sphi 0, %s122
      %s124 = sphi 0, %s122
      %s125 = sphi 0, %s124
      %s139 = sphi 0, %s125
      %s143 = sphi 0, %s143
      %s145 = sphi 0, %s143
      %s146 = sphi 0, %s145
      %s160 = sphi 0, %s146
      %s164 = sphi 0, %s164
      %s166 = sphi 0, %s164
      %s167 = sphi 0, %s166
      %s181 = sphi 0, %s167
      %s185 = sphi 0, %s185
      %s187 = sphi 0, %s185
      %s188 = sphi 0, %s187
      %s202 = sphi 0, %s188
      %s206 = sphi 0, %s206
      %s208 = sphi 0, %s206
      %s209 = sphi 0, %s208
      %s223 = sphi 0, %s209
      %s227 = sphi 0, %s227
      %s229 = sphi 0, %s227
      %s230 = sphi 0, %s229
      %s244 = sphi 0, %s230
      %s252 = sphi 0, %s254
      %s255 = sphi 0, %s252
      %s256 = sphi 0, %s255
      %s272 = sphi 0, %s256
      %s280 = sphi 0, %s282
      %s283 = sphi 0, %s280
      %s284 = sphi 0, %s283
      %s300 = sphi 0, %s284
      %s308 = sphi 0, %s310
      %s311 = sphi 0, %s308
      %s312 = sphi 0, %s311
      %s328 = sphi 0, %s312
    $region4: #{tpu_custom_call.1} parent=1 // loop_header_branch
      %25 = sbr.rel (%p23) target = $region8
    $region5: #{tpu_custom_call.1} parent=1 // loop_body
      %s27 = ssub.s32 %s22, 1
      %s28 = ssub.s32 %s22, 2
      %s35 = sadd.s32 1, %s30
      %p36 = scmp.ge.s32.totalorder %s35, 1
      %s37 = scalar_select %p36, 0, %s35
      %s38 = sadd.s32 1, %s29
      %s39 = scalar_select %p36, %s38, %s29
      %p40 = scmp.ge.s32.totalorder %s39, 2
      %s41 = scalar_select %p40, 0, %s39
      %s42 = ssub.s32 %s29, %s41
      %s43 = ssub.s32 %s30, %s37
      %s44 = sor.u32 %s42, %s43
      %p45 = scmp.eq.s32.totalorder %s44, 0
      %s47 = sadd.s32 %s46, 1
      %s48 = scalar_select %p45, %s46, %s47
      %p51 = pneg %p45
      %p52 = scmp.eq.s32.totalorder %s22, 1
      %p53 = por %p51, %p52
      %p54 = scmp.ne.s32.totalorder %s46, %s49
      %p55 = scmp.eq.s32.totalorder %s22, 0
      %p56 = por %p54, %p55
      %p57 = scmp.ne.s32.totalorder %s46, %s49
      %p58 = scmp.eq.s32.totalorder %s27, 1
      %p59 = por %p57, %p58
      %p60 = scmp.ne.s32.totalorder %s49, %s50
      %p61 = scmp.eq.s32.totalorder %s27, 0
      %p62 = por %p60, %p61
      %p63 = scmp.ne.s32.totalorder %s49, %s50
      %p64 = scmp.eq.s32.totalorder %s28, 1
      %p65 = por %p63, %p64
      %p67 = scmp.ne.s32.totalorder %s50, %s66
      %p68 = scmp.eq.s32.totalorder %s28, 0
      %p69 = por %p67, %p68
      %s70 = ssub.s32 %s29, %s41
      %p71 = scmp.eq.s32.totalorder %s70, 0
      %s73 = sadd.s32 %s72, 1
      %s74 = scalar_select %p71, %s72, %s73
      %p77 = pneg %p71
      %p78 = scmp.eq.s32.totalorder %s22, 1
      %p79 = por %p77, %p78
      %p80 = scmp.ne.s32.totalorder %s72, %s75
      %p81 = scmp.eq.s32.totalorder %s22, 0
      %p82 = por %p80, %p81
      %p83 = scmp.ne.s32.totalorder %s72, %s75
      %p84 = scmp.eq.s32.totalorder %s27, 1
      %p85 = por %p83, %p84
      %p86 = scmp.ne.s32.totalorder %s75, %s76
      %p87 = scmp.eq.s32.totalorder %s27, 0
      %p88 = por %p86, %p87
      %p89 = scmp.ne.s32.totalorder %s75, %s76
      %p90 = scmp.eq.s32.totalorder %s28, 1
      %p91 = por %p89, %p90
      %p93 = scmp.ne.s32.totalorder %s76, %s92
      %p94 = scmp.eq.s32.totalorder %s28, 0
      %p95 = por %p93, %p94
      %s96 = ssub.s32 %s29, %s41
      %p97 = scmp.eq.s32.totalorder %s96, 0
      %s99 = sadd.s32 %s98, 1
      %s100 = scalar_select %p97, %s98, %s99
      %p103 = pneg %p97
      %p104 = scmp.eq.s32.totalorder %s22, 1
      %p105 = por %p103, %p104
      %p106 = scmp.ne.s32.totalorder %s98, %s101
      %p107 = scmp.eq.s32.totalorder %s22, 0
      %p108 = por %p106, %p107
      %p109 = scmp.ne.s32.totalorder %s98, %s101
      %p110 = scmp.eq.s32.totalorder %s27, 1
      %p111 = por %p109, %p110
      %p112 = scmp.ne.s32.totalorder %s101, %s102
      %p113 = scmp.eq.s32.totalorder %s27, 0
      %p114 = por %p112, %p113
      %p115 = scmp.ne.s32.totalorder %s101, %s102
      %p116 = scmp.eq.s32.totalorder %s28, 1
      %p117 = por %p115, %p116
      %p119 = scmp.ne.s32.totalorder %s102, %s118
      %p120 = scmp.eq.s32.totalorder %s28, 0
      %p121 = por %p119, %p120
      %s123 = sadd.s32 %s122, 1
      %p126 = scmp.eq.s32.totalorder %s22, 1
      %p127 = scmp.ne.s32.totalorder %s122, %s124
      %p128 = scmp.eq.s32.totalorder %s22, 0
      %p129 = por %p127, %p128
      %p130 = scmp.ne.s32.totalorder %s122, %s124
      %p131 = scmp.eq.s32.totalorder %s27, 1
      %p132 = por %p130, %p131
      %p133 = scmp.ne.s32.totalorder %s124, %s125
      %p134 = scmp.eq.s32.totalorder %s27, 0
      %p135 = por %p133, %p134
      %p136 = scmp.ne.s32.totalorder %s124, %s125
      %p137 = scmp.eq.s32.totalorder %s28, 1
      %p138 = por %p136, %p137
      %p140 = scmp.ne.s32.totalorder %s125, %s139
      %p141 = scmp.eq.s32.totalorder %s28, 0
      %p142 = por %p140, %p141
      %s144 = sadd.s32 %s143, 1
      %p147 = scmp.eq.s32.totalorder %s22, 1
      %p148 = scmp.ne.s32.totalorder %s143, %s145
      %p149 = scmp.eq.s32.totalorder %s22, 0
      %p150 = por %p148, %p149
      %p151 = scmp.ne.s32.totalorder %s143, %s145
      %p152 = scmp.eq.s32.totalorder %s27, 1
      %p153 = por %p151, %p152
      %p154 = scmp.ne.s32.totalorder %s145, %s146
      %p155 = scmp.eq.s32.totalorder %s27, 0
      %p156 = por %p154, %p155
      %p157 = scmp.ne.s32.totalorder %s145, %s146
      %p158 = scmp.eq.s32.totalorder %s28, 1
      %p159 = por %p157, %p158
      %p161 = scmp.ne.s32.totalorder %s146, %s160
      %p162 = scmp.eq.s32.totalorder %s28, 0
      %p163 = por %p161, %p162
      %s165 = sadd.s32 %s164, 1
      %p168 = scmp.eq.s32.totalorder %s22, 1
      %p169 = scmp.ne.s32.totalorder %s164, %s166
      %p170 = scmp.eq.s32.totalorder %s22, 0
      %p171 = por %p169, %p170
      %p172 = scmp.ne.s32.totalorder %s164, %s166
      %p173 = scmp.eq.s32.totalorder %s27, 1
      %p174 = por %p172, %p173
      %p175 = scmp.ne.s32.totalorder %s166, %s167
      %p176 = scmp.eq.s32.totalorder %s27, 0
      %p177 = por %p175, %p176
      %p178 = scmp.ne.s32.totalorder %s166, %s167
      %p179 = scmp.eq.s32.totalorder %s28, 1
      %p180 = por %p178, %p179
      %p182 = scmp.ne.s32.totalorder %s167, %s181
      %p183 = scmp.eq.s32.totalorder %s28, 0
      %p184 = por %p182, %p183
      %s186 = sadd.s32 %s185, 1
      %p189 = scmp.eq.s32.totalorder %s22, 1
      %p190 = scmp.ne.s32.totalorder %s185, %s187
      %p191 = scmp.eq.s32.totalorder %s22, 0
      %p192 = por %p190, %p191
      %p193 = scmp.ne.s32.totalorder %s185, %s187
      %p194 = scmp.eq.s32.totalorder %s27, 1
      %p195 = por %p193, %p194
      %p196 = scmp.ne.s32.totalorder %s187, %s188
      %p197 = scmp.eq.s32.totalorder %s27, 0
      %p198 = por %p196, %p197
      %p199 = scmp.ne.s32.totalorder %s187, %s188
      %p200 = scmp.eq.s32.totalorder %s28, 1
      %p201 = por %p199, %p200
      %p203 = scmp.ne.s32.totalorder %s188, %s202
      %p204 = scmp.eq.s32.totalorder %s28, 0
      %p205 = por %p203, %p204
      %s207 = sadd.s32 %s206, 1
      %p210 = scmp.eq.s32.totalorder %s22, 1
      %p211 = scmp.ne.s32.totalorder %s206, %s208
      %p212 = scmp.eq.s32.totalorder %s22, 0
      %p213 = por %p211, %p212
      %p214 = scmp.ne.s32.totalorder %s206, %s208
      %p215 = scmp.eq.s32.totalorder %s27, 1
      %p216 = por %p214, %p215
      %p217 = scmp.ne.s32.totalorder %s208, %s209
      %p218 = scmp.eq.s32.totalorder %s27, 0
      %p219 = por %p217, %p218
      %p220 = scmp.ne.s32.totalorder %s208, %s209
      %p221 = scmp.eq.s32.totalorder %s28, 1
      %p222 = por %p220, %p221
      %p224 = scmp.ne.s32.totalorder %s209, %s223
      %p225 = scmp.eq.s32.totalorder %s28, 0
      %p226 = por %p224, %p225
      %s228 = sadd.s32 %s227, 1
      %p231 = scmp.eq.s32.totalorder %s22, 1
      %p232 = scmp.ne.s32.totalorder %s227, %s229
      %p233 = scmp.eq.s32.totalorder %s22, 0
      %p234 = por %p232, %p233
      %p235 = scmp.ne.s32.totalorder %s227, %s229
      %p236 = scmp.eq.s32.totalorder %s27, 1
      %p237 = por %p235, %p236
      %p238 = scmp.ne.s32.totalorder %s229, %s230
      %p239 = scmp.eq.s32.totalorder %s27, 0
      %p240 = por %p238, %p239
      %p241 = scmp.ne.s32.totalorder %s229, %s230
      %p242 = scmp.eq.s32.totalorder %s28, 1
      %p243 = por %p241, %p242
      %p245 = scmp.ne.s32.totalorder %s230, %s244
      %p246 = scmp.eq.s32.totalorder %s28, 0
      %p247 = por %p245, %p246
      %s248 = ssub.s32 %s29, %s41
      %s249 = ssub.s32 %s30, %s37
      %s250 = sor.u32 %s248, %s249
      %p251 = scmp.eq.s32.totalorder %s250, 0
      %s253 = sadd.s32 %s252, 1
      %s254 = scalar_select %p251, %s252, %s253
      %p257 = pneg %p251
      %p258 = scmp.eq.s32.totalorder %s22, 1
      %p259 = por %p257, %p258
      %p260 = scmp.ne.s32.totalorder %s252, %s255
      %p261 = scmp.eq.s32.totalorder %s22, 0
      %p262 = por %p260, %p261
      %p263 = scmp.ne.s32.totalorder %s252, %s255
      %p264 = scmp.eq.s32.totalorder %s27, 1
      %p265 = por %p263, %p264
      %p266 = scmp.ne.s32.totalorder %s255, %s256
      %p267 = scmp.eq.s32.totalorder %s27, 0
      %p268 = por %p266, %p267
      %p269 = scmp.ne.s32.totalorder %s255, %s256
      %p270 = scmp.eq.s32.totalorder %s28, 1
      %p271 = por %p269, %p270
      %p273 = scmp.ne.s32.totalorder %s256, %s272
      %p274 = scmp.eq.s32.totalorder %s28, 0
      %p275 = por %p273, %p274
      %s276 = ssub.s32 %s29, %s41
      %s277 = ssub.s32 %s30, %s37
      %s278 = sor.u32 %s276, %s277
      %p279 = scmp.eq.s32.totalorder %s278, 0
      %s281 = sadd.s32 %s280, 1
      %s282 = scalar_select %p279, %s280, %s281
      %p285 = pneg %p279
      %p286 = scmp.eq.s32.totalorder %s22, 1
      %p287 = por %p285, %p286
      %p288 = scmp.ne.s32.totalorder %s280, %s283
      %p289 = scmp.eq.s32.totalorder %s22, 0
      %p290 = por %p288, %p289
      %p291 = scmp.ne.s32.totalorder %s280, %s283
      %p292 = scmp.eq.s32.totalorder %s27, 1
      %p293 = por %p291, %p292
      %p294 = scmp.ne.s32.totalorder %s283, %s284
      %p295 = scmp.eq.s32.totalorder %s27, 0
      %p296 = por %p294, %p295
      %p297 = scmp.ne.s32.totalorder %s283, %s284
      %p298 = scmp.eq.s32.totalorder %s28, 1
      %p299 = por %p297, %p298
      %p301 = scmp.ne.s32.totalorder %s284, %s300
      %p302 = scmp.eq.s32.totalorder %s28, 0
      %p303 = por %p301, %p302
      %s304 = ssub.s32 %s29, %s41
      %s305 = ssub.s32 %s30, %s37
      %s306 = sor.u32 %s304, %s305
      %p307 = scmp.eq.s32.totalorder %s306, 0
      %s309 = sadd.s32 %s308, 1
      %s310 = scalar_select %p307, %s308, %s309
      %p313 = pneg %p307
      %p314 = scmp.eq.s32.totalorder %s22, 1
      %p315 = por %p313, %p314
      %p316 = scmp.ne.s32.totalorder %s308, %s311
      %p317 = scmp.eq.s32.totalorder %s22, 0
      %p318 = por %p316, %p317
      %p319 = scmp.ne.s32.totalorder %s308, %s311
      %p320 = scmp.eq.s32.totalorder %s27, 1
      %p321 = por %p319, %p320
      %p322 = scmp.ne.s32.totalorder %s311, %s312
      %p323 = scmp.eq.s32.totalorder %s27, 0
      %p324 = por %p322, %p323
      %p325 = scmp.ne.s32.totalorder %s311, %s312
      %p326 = scmp.eq.s32.totalorder %s28, 1
      %p327 = por %p325, %p326
      %p329 = scmp.ne.s32.totalorder %s312, %s328
      %p330 = scmp.eq.s32.totalorder %s28, 0
      %p331 = por %p329, %p330
      %p332 = scmp.le.s32.totalorder 1, %s22
      %p333 = scmp.lt.s32.totalorder %s22, 3
      %p334 = pnand %p332, %p333
      %p335 = pneg %p334
      // Predicated region
      $region9: #{tpu_custom_call.1} parent=5 // pred_check
        _
      $region10: #{tpu_custom_call.1} parent=5 // pred_check_branch
        %337 = sbr.rel (%p334) target = $region12
      $region11: #{tpu_custom_call.1} parent=5 // pred_region
        %s338 = ssub.s32 %s22, 1
        // Predicated region
        $region13: #{tpu_custom_call.1} parent=11 // pred_check
          %p339 = pneg %p135
        $region14: #{tpu_custom_call.1} parent=11 // pred_check_branch
          %341 = sbr.rel (%p339) target = $region16
        $region15: #{tpu_custom_call.1} parent=11 // pred_region
          _
        $region16: #{tpu_custom_call.1} parent=11 // pred_fallthru
          _
        // Predicated region
        $region17: #{tpu_custom_call.1} parent=11 // pred_check
          %p342 = pneg %p156
        $region18: #{tpu_custom_call.1} parent=11 // pred_check_branch
          %344 = sbr.rel (%p342) target = $region20
        $region19: #{tpu_custom_call.1} parent=11 // pred_region
          _
        $region20: #{tpu_custom_call.1} parent=11 // pred_fallthru
          _
        // Predicated region
        $region21: #{tpu_custom_call.1} parent=11 // pred_check
          %p345 = pneg %p177
        $region22: #{tpu_custom_call.1} parent=11 // pred_check_branch
          %347 = sbr.rel (%p345) target = $region24
        $region23: #{tpu_custom_call.1} parent=11 // pred_region
          _
        $region24: #{tpu_custom_call.1} parent=11 // pred_fallthru
          _
        // Predicated region
        $region25: #{tpu_custom_call.1} parent=11 // pred_check
          %p348 = pneg %p198
        $region26: #{tpu_custom_call.1} parent=11 // pred_check_branch
          %350 = sbr.rel (%p348) target = $region28
        $region27: #{tpu_custom_call.1} parent=11 // pred_region
          _
        $region28: #{tpu_custom_call.1} parent=11 // pred_fallthru
          _
        // Predicated region
        $region29: #{tpu_custom_call.1} parent=11 // pred_check
          %p351 = pneg %p219
        $region30: #{tpu_custom_call.1} parent=11 // pred_check_branch
          %353 = sbr.rel (%p351) target = $region32
        $region31: #{tpu_custom_call.1} parent=11 // pred_region
          %s355 = ssub.s32 512, 512
          %356 = vsyncadd [#allocation3], %s355
          %s357 = sshll.u32 [#allocation2], 4
          %s358 = int_to_ptr.vmem [resolvable:$true] %s357
          %363 = dma.hbm_to_vmem [thread:$0]  %s7, 512, %s358, [#allocation3], 64, 64, 4
        $region32: #{tpu_custom_call.1} parent=11 // pred_fallthru
          _
        // Predicated region
        $region33: #{tpu_custom_call.1} parent=11 // pred_check
          %p364 = pneg %p240
        $region34: #{tpu_custom_call.1} parent=11 // pred_check_branch
          %366 = sbr.rel (%p364) target = $region36
        $region35: #{tpu_custom_call.1} parent=11 // pred_region
          _
        $region36: #{tpu_custom_call.1} parent=11 // pred_fallthru
          _
      $region12: #{tpu_custom_call.1} parent=5 // pred_fallthru
        _
      %p367 = scmp.lt.s32.totalorder %s22, 2
      // Predicated region
      $region37: #{tpu_custom_call.1} parent=5 // pred_check
        %p368 = pneg %p367
      $region38: #{tpu_custom_call.1} parent=5 // pred_check_branch
        %370 = sbr.rel (%p368) target = $region40
      $region39: #{tpu_custom_call.1} parent=5 // pred_region
        // Predicated region
        $region41: #{tpu_custom_call.1} parent=39 // pred_check
          %p371 = pneg %p56
        $region42: #{tpu_custom_call.1} parent=39 // pred_check_branch
          %373 = sbr.rel (%p371) target = $region44
        $region43: #{tpu_custom_call.1} parent=39 // pred_region
          %s374 = smul.u32 2, %s30
          %p375 = scmp.lt.s32.totalorder %s29, 1
          %s376 = scalar_select %p375, %s29, 1
          %p377 = scmp.lt.s32.totalorder %s374, 1
          %s378 = scalar_select %p377, %s374, 1
          %s379 = smul.addr %s376, 16
          %s380 = sadd.s32 %s378, %s379
          %s381 = smul.addr %s380, 8
          %s382 = scalar_lea.vmem %s0, %s381
          %s383 = smul.u32 2, %s30
        $region44: #{tpu_custom_call.1} parent=39 // pred_fallthru
          _
        // Predicated region
        $region45: #{tpu_custom_call.1} parent=39 // pred_check
          %p384 = pneg %p82
        $region46: #{tpu_custom_call.1} parent=39 // pred_check_branch
          %386 = sbr.rel (%p384) target = $region48
        $region47: #{tpu_custom_call.1} parent=39 // pred_region
          %p387 = scmp.lt.s32.totalorder %s29, 1
          %s388 = scalar_select %p387, %s29, 1
          %s389 = smul.addr %s388, 8
          %s390 = smul.addr %s389, 8
          %s391 = scalar_lea.vmem %s1, %s390
        $region48: #{tpu_custom_call.1} parent=39 // pred_fallthru
          _
        // Predicated region
        $region49: #{tpu_custom_call.1} parent=39 // pred_check
          %p392 = pneg %p108
        $region50: #{tpu_custom_call.1} parent=39 // pred_check_branch
          %394 = sbr.rel (%p392) target = $region52
        $region51: #{tpu_custom_call.1} parent=39 // pred_region
          %p395 = scmp.lt.s32.totalorder %s29, 1
          %s396 = scalar_select %p395, %s29, 1
          %s397 = smul.addr %s396, 8
          %s398 = smul.addr %s397, 8
          %s399 = scalar_lea.vmem %s2, %s398
        $region52: #{tpu_custom_call.1} parent=39 // pred_fallthru
          _
      $region40: #{tpu_custom_call.1} parent=5 // pred_fallthru
        _
      %p400 = scmp.le.s32.totalorder 1, %s22
      %p401 = scmp.lt.s32.totalorder %s22, 3
      %p402 = pnand %p400, %p401
      %p403 = pneg %p402
      // Predicated region
      $region53: #{tpu_custom_call.1} parent=5 // pred_check
        _
      $region54: #{tpu_custom_call.1} parent=5 // pred_check_branch
        %405 = sbr.rel (%p402) target = $region56
      $region55: #{tpu_custom_call.1} parent=5 // pred_region
        %s406 = ssub.s32 %s22, 1
        // Predicated region
        $region57: #{tpu_custom_call.1} parent=55 // pred_check
          %p407 = pneg %p219
        $region58: #{tpu_custom_call.1} parent=55 // pred_check_branch
          %409 = sbr.rel (%p407) target = $region60
        $region59: #{tpu_custom_call.1} parent=55 // pred_region
          %410 = dma.done [#allocation3], 512
        $region60: #{tpu_custom_call.1} parent=55 // pred_fallthru
          _
        %s411 = smul.u32 2, %s32
        %p412 = scmp.lt.s32.totalorder %s31, 1
        %s413 = scalar_select %p412, %s31, 1
        %p414 = scmp.lt.s32.totalorder %s411, 1
        %s415 = scalar_select %p414, %s411, 1
        %s416 = smul.addr %s413, 16
        %s417 = sadd.s32 %s415, %s416
        %s418 = smul.addr %s417, 8
        %s419 = scalar_lea.vmem %s0, %s418
        %p420 = pneg %p62
        %p421 = pneg %p59
        %p422 = scmp.lt.s32.totalorder %s31, 1
        %s423 = scalar_select %p422, %s31, 1
        %s424 = smul.addr %s423, 8
        %s425 = smul.addr %s424, 8
        %s426 = scalar_lea.vmem %s1, %s425
        %p427 = pneg %p88
        %p428 = pneg %p85
        %p429 = scmp.lt.s32.totalorder %s31, 1
        %s430 = scalar_select %p429, %s31, 1
        %s431 = smul.addr %s430, 8
        %s432 = smul.addr %s431, 8
        %s433 = scalar_lea.vmem %s2, %s432
        %p434 = pneg %p114
        %p435 = pneg %p111
        %p436 = pneg %p135
        %p437 = pneg %p132
        %p438 = pneg %p156
        %p439 = pneg %p153
        %p440 = pneg %p177
        %p441 = pneg %p174
        %p442 = pneg %p198
        %p443 = pneg %p195
        %p444 = pneg %p219
        %p445 = pneg %p216
        %p446 = pneg %p240
        %p447 = pneg %p237
        %p448 = pneg %p268
        %p449 = pneg %p265
        %s450 = smul.u32 32, %s32
        %p451 = scmp.lt.s32.totalorder %s31, 1
        %s452 = scalar_select %p451, %s31, 1
        %p453 = scmp.lt.s32.totalorder %s450, 31
        %s454 = scalar_select %p453, %s450, 31
        %s455 = smul.addr %s452, 32
        %s456 = sadd.s32 %s454, %s455
        %s457 = smul.addr %s456, 4
        %s458 = scalar_lea.vmem %s9, %s457
        %p459 = pneg %p296
        %p460 = pneg %p293
        %s461 = sand.u32 %s283, 1
        %s462 = scalar_lea.sflag [#allocation4], %s461
        %s463 = sand.u32 %s283, 1
        %s464 = smul.addr %s463, 64
        %s465 = scalar_lea.vmem [#allocation5], %s464
        %p466 = pneg %p324
        %p467 = pneg %p321
        %s468 = smul.u32 32, %s32
        %p469 = scmp.lt.s32.totalorder %s31, 1
        %s470 = scalar_select %p469, %s31, 1
        %p471 = scmp.lt.s32.totalorder %s468, 31
        %s472 = scalar_select %p471, %s468, 31
        %s473 = smul.addr %s470, 32
        %s474 = sadd.s32 %s472, %s473
        %s475 = smul.addr %s474, 4
        %s476 = scalar_lea.vmem %s11, %s475
        %s477 = smul.u32 2, %s32
        %p478 = scmp.lt.s32.totalorder %s31, 1
        %s479 = scalar_select %p478, %s31, 1
        %p480 = scmp.lt.s32.totalorder %s477, 1
        %s481 = scalar_select %p480, %s477, 1
        %s482 = smul.addr %s479, 16
        %s483 = sadd.s32 %s481, %s482
        %s484 = smul.addr %s483, 8
        %s485 = scalar_lea.vmem %s0, %s484
        %s486 = smul.u32 2, %s32
        %p487 = scmp.lt.s32.totalorder %s31, 1
        %s488 = scalar_select %p487, %s31, 1
        %s489 = smul.addr %s488, 8
        %s490 = smul.addr %s489, 8
        %s491 = scalar_lea.vmem %s1, %s490
        %p492 = scmp.lt.s32.totalorder %s31, 1
        %s493 = scalar_select %p492, %s31, 1
        %s494 = smul.addr %s493, 8
        %s495 = smul.addr %s494, 8
        %s496 = scalar_lea.vmem %s2, %s495
        %s497 = smul.u32 32, %s32
        %p498 = scmp.lt.s32.totalorder %s31, 1
        %s499 = scalar_select %p498, %s31, 1
        %p500 = scmp.lt.s32.totalorder %s497, 31
        %s501 = scalar_select %p500, %s497, 31
        %s502 = smul.addr %s499, 32
        %s503 = sadd.s32 %s501, %s502
        %s504 = smul.addr %s503, 4
        %s505 = scalar_lea.vmem %s9, %s504
        %s506 = smul.u32 32, %s32
        %s507 = smul.u32 2, %s32
        %s508 = smul.u32 32, %s32
        %p509 = scmp.lt.s32.totalorder %s31, 1
        %s510 = scalar_select %p509, %s31, 1
        %p511 = scmp.lt.s32.totalorder %s508, 31
        %s512 = scalar_select %p511, %s508, 31
        %s513 = smul.addr %s510, 32
        %s514 = sadd.s32 %s512, %s513
        %s515 = smul.addr %s514, 4
        %s516 = scalar_lea.vmem %s11, %s515
        %s517 = smul.u32 32, %s32
        %v519 = vld [vmem:[%s485] sm:$0xff]
        %v520 = vld [vmem:[%s485 + $0x8] sm:$0xff]
        %v521 = vld [vmem:[%s485 + $0x10] sm:$0xff]
        %v522 = vld [vmem:[%s485 + $0x18] sm:$0xff]
        %v523 = vld [vmem:[%s485 + $0x20] sm:$0xff]
        %v524 = vld [vmem:[%s485 + $0x28] sm:$0xff]
        %v525 = vld [vmem:[%s485 + $0x30] sm:$0xff]
        %v526 = vld [vmem:[%s485 + $0x38] sm:$0xff]
        %v527 = vld [vmem:[%s485 + $0x40] sm:$0xff]
        %v528 = vld [vmem:[%s485 + $0x48] sm:$0xff]
        %v529 = vld [vmem:[%s485 + $0x50] sm:$0xff]
        %v530 = vld [vmem:[%s485 + $0x58] sm:$0xff]
        %v531 = vld [vmem:[%s485 + $0x60] sm:$0xff]
        %v532 = vld [vmem:[%s485 + $0x68] sm:$0xff]
        %v533 = vld [vmem:[%s485 + $0x70] sm:$0xff]
        %v534 = vld [vmem:[%s485 + $0x78] sm:$0xff]
        %v535 = vld [vmem:[%s491] sm:$0xff]
        %v536 = vld [vmem:[%s491 + $0x8] sm:$0xff]
        %v537 = vld [vmem:[%s491 + $0x10] sm:$0xff]
        %v538 = vld [vmem:[%s491 + $0x18] sm:$0xff]
        %v539 = vld [vmem:[%s491 + $0x20] sm:$0xff]
        %v540 = vld [vmem:[%s491 + $0x28] sm:$0xff]
        %v541 = vld [vmem:[%s491 + $0x30] sm:$0xff]
        %v542 = vld [vmem:[%s491 + $0x38] sm:$0xff]
        %544 = vset.pattern.permute.xlu0 0
        %545 = vperm.xlu0 %544, %v535
        %v546 = vpop.permute.xlu0 %545
        %549 = vset.pattern.permute.xlu0 0
        %550 = vperm.xlu0 %549, %v536
        %v551 = vpop.permute.xlu0 %550
        %554 = vset.pattern.permute.xlu0 0
        %555 = vperm.xlu0 %554, %v537
        %v556 = vpop.permute.xlu0 %555
        %559 = vset.pattern.permute.xlu0 0
        %560 = vperm.xlu0 %559, %v538
        %v561 = vpop.permute.xlu0 %560
        %564 = vset.pattern.permute.xlu0 0
        %565 = vperm.xlu0 %564, %v539
        %v566 = vpop.permute.xlu0 %565
        %569 = vset.pattern.permute.xlu0 0
        %570 = vperm.xlu0 %569, %v540
        %v571 = vpop.permute.xlu0 %570
        %574 = vset.pattern.permute.xlu0 0
        %575 = vperm.xlu0 %574, %v541
        %v576 = vpop.permute.xlu0 %575
        %579 = vset.pattern.permute.xlu0 0
        %580 = vperm.xlu0 %579, %v542
        %v581 = vpop.permute.xlu0 %580
        %v583 = vmul.f32 %v519, %v546
        %v584 = vmul.f32 %v520, %v546
        %v585 = vmul.f32 %v521, %v551
        %v586 = vmul.f32 %v522, %v551
        %v587 = vmul.f32 %v523, %v556
        %v588 = vmul.f32 %v524, %v556
        %v589 = vmul.f32 %v525, %v561
        %v590 = vmul.f32 %v526, %v561
        %v591 = vmul.f32 %v527, %v566
        %v592 = vmul.f32 %v528, %v566
        %v593 = vmul.f32 %v529, %v571
        %v594 = vmul.f32 %v530, %v571
        %v595 = vmul.f32 %v531, %v576
        %v596 = vmul.f32 %v532, %v576
        %v597 = vmul.f32 %v533, %v581
        %v598 = vmul.f32 %v534, %v581
        %v599 = vld [vmem:[%s496] sm:$0xff]
        %v600 = vld [vmem:[%s496 + $0x8] sm:$0xff]
        %v601 = vld [vmem:[%s496 + $0x10] sm:$0xff]
        %v602 = vld [vmem:[%s496 + $0x18] sm:$0xff]
        %v603 = vld [vmem:[%s496 + $0x20] sm:$0xff]
        %v604 = vld [vmem:[%s496 + $0x28] sm:$0xff]
        %v605 = vld [vmem:[%s496 + $0x30] sm:$0xff]
        %v606 = vld [vmem:[%s496 + $0x38] sm:$0xff]
        %608 = vset.pattern.permute.xlu0 0
        %609 = vperm.xlu0 %608, %v599
        %v610 = vpop.permute.xlu0 %609
        %613 = vset.pattern.permute.xlu0 0
        %614 = vperm.xlu0 %613, %v600
        %v615 = vpop.permute.xlu0 %614
        %618 = vset.pattern.permute.xlu0 0
        %619 = vperm.xlu0 %618, %v601
        %v620 = vpop.permute.xlu0 %619
        %623 = vset.pattern.permute.xlu0 0
        %624 = vperm.xlu0 %623, %v602
        %v625 = vpop.permute.xlu0 %624
        %628 = vset.pattern.permute.xlu0 0
        %629 = vperm.xlu0 %628, %v603
        %v630 = vpop.permute.xlu0 %629
        %633 = vset.pattern.permute.xlu0 0
        %634 = vperm.xlu0 %633, %v604
        %v635 = vpop.permute.xlu0 %634
        %638 = vset.pattern.permute.xlu0 0
        %639 = vperm.xlu0 %638, %v605
        %v640 = vpop.permute.xlu0 %639
        %643 = vset.pattern.permute.xlu0 0
        %644 = vperm.xlu0 %643, %v606
        %v645 = vpop.permute.xlu0 %644
        %v647 = vadd.f32 %v583, %v610
        %v648 = vadd.f32 %v584, %v610
        %v649 = vadd.f32 %v585, %v615
        %v650 = vadd.f32 %v586, %v615
        %v651 = vadd.f32 %v587, %v620
        %v652 = vadd.f32 %v588, %v620
        %v653 = vadd.f32 %v589, %v625
        %v654 = vadd.f32 %v590, %v625
        %v655 = vadd.f32 %v591, %v630
        %v656 = vadd.f32 %v592, %v630
        %v657 = vadd.f32 %v593, %v635
        %v658 = vadd.f32 %v594, %v635
        %v659 = vadd.f32 %v595, %v640
        %v660 = vadd.f32 %v596, %v640
        %v661 = vadd.f32 %v597, %v645
        %v662 = vadd.f32 %v598, %v645
        %v663 = vpack.c.bf16 %v649, %v647
        %v664 = vpack.c.bf16 %v650, %v648
        %v665 = vpack.c.bf16 %v653, %v651
        %v666 = vpack.c.bf16 %v654, %v652
        %v667 = vpack.c.bf16 %v657, %v655
        %v668 = vpack.c.bf16 %v658, %v656
        %v669 = vpack.c.bf16 %v661, %v659
        %v670 = vpack.c.bf16 %v662, %v660
        %v671 = vld [vmem:[%s5] sm:$0xf]
        %v672 = vld [vmem:[%s5 + $0x4] sm:$0xf]
        %v673 = vld [vmem:[%s5 + $0x8] sm:$0xf]
        %v674 = vld [vmem:[%s5 + $0xc] sm:$0xf]
        %v675 = vld [vmem:[%s5 + $0x10] sm:$0xf]
        %v676 = vld [vmem:[%s5 + $0x14] sm:$0xf]
        %v677 = vld [vmem:[%s5 + $0x18] sm:$0xf]
        %v678 = vld [vmem:[%s5 + $0x1c] sm:$0xf]
        %v679 = vld [vmem:[%s6] sm:$0xff]
        %v680 = vld [vmem:[%s6 + $0x8] sm:$0xff]
        %v681 = vld [vmem:[%s6 + $0x10] sm:$0xff]
        %v682 = vld [vmem:[%s6 + $0x18] sm:$0xff]
        %v683 = vld [vmem:[%s6 + $0x20] sm:$0xff]
        %v684 = vld [vmem:[%s6 + $0x28] sm:$0xff]
        %v685 = vld [vmem:[%s6 + $0x30] sm:$0xff]
        %v686 = vld [vmem:[%s6 + $0x38] sm:$0xff]
        %688 = vset.pattern.permute.xlu0 0
        %689 = vperm.xlu0 %688, %v679
        %v690 = vpop.permute.xlu0 %689
        %693 = vset.pattern.permute.xlu0 0
        %694 = vperm.xlu0 %693, %v680
        %v695 = vpop.permute.xlu0 %694
        %698 = vset.pattern.permute.xlu0 0
        %699 = vperm.xlu0 %698, %v681
        %v700 = vpop.permute.xlu0 %699
        %703 = vset.pattern.permute.xlu0 0
        %704 = vperm.xlu0 %703, %v682
        %v705 = vpop.permute.xlu0 %704
        %708 = vset.pattern.permute.xlu0 0
        %709 = vperm.xlu0 %708, %v683
        %v710 = vpop.permute.xlu0 %709
        %713 = vset.pattern.permute.xlu0 0
        %714 = vperm.xlu0 %713, %v684
        %v715 = vpop.permute.xlu0 %714
        %718 = vset.pattern.permute.xlu0 0
        %719 = vperm.xlu0 %718, %v685
        %v720 = vpop.permute.xlu0 %719
        %723 = vset.pattern.permute.xlu0 0
        %724 = vperm.xlu0 %723, %v686
        %v725 = vpop.permute.xlu0 %724
        %v735 = vunpack.c.l.b16 %v671
        %v736 = vunpack.c.l.b16 %v672
        %v737 = vunpack.c.l.b16 %v673
        %v738 = vunpack.c.l.b16 %v674
        %v739 = vunpack.c.l.b16 %v675
        %v740 = vunpack.c.l.b16 %v676
        %v741 = vunpack.c.l.b16 %v677
        %v742 = vunpack.c.l.b16 %v678
        %v743 = vpack.c.b16 %v736, %v735
        %v744 = vpack.c.b16 %v738, %v737
        %v745 = vpack.c.b16 %v740, %v739
        %v746 = vpack.c.b16 %v742, %v741
        %vm747 = vcmask 523264
        %v749 = vsel %vm747, %v743, 0
        %v752 = vsel %vm747, %v744, 0
        %v755 = vsel %vm747, %v745, 0
        %v758 = vsel %vm747, %v746, 0
        %760 = vmatprep.subr.bf16.mxu0 %v664
        %761 = vmatpush1.bf16.msra.mxu0 %v663
        %762 = vmatprep.subr.bf16.mxu0 %v666
        %763 = vmatpush1.bf16.msra.mxu0 %v665
        %764 = vmatprep.subr.bf16.mxu0 %v668
        %765 = vmatpush1.bf16.msra.mxu0 %v667
        %766 = vmatprep.subr.bf16.mxu0 %v670
        %767 = vmatpush1.bf16.msra.mxu0 %v669
        %768 = vmatprep.subr.bf16.mxu0 0
        %769 = vmatpush1.bf16.msra.mxu0 0
        %770 = vmatprep.subr.bf16.mxu0 0
        %771 = vmatpush1.bf16.msra.mxu0 0
        %772 = vmatprep.subr.bf16.mxu0 0
        %773 = vmatpush1.bf16.msra.mxu0 0
        %774 = vmatprep.subr.bf16.mxu0 0
        %775 = vmatpush1.bf16.msra.mxu0 0
        %776 = vmatprep.subr.bf16.mxu0 0
        %777 = vmatpush1.bf16.msra.mxu0 0
        %778 = vmatprep.subr.bf16.mxu0 0
        %779 = vmatpush1.bf16.msra.mxu0 0
        %780 = vmatprep.subr.bf16.mxu0 0
        %781 = vmatpush1.bf16.msra.mxu0 0
        %782 = vmatprep.subr.bf16.mxu0 0
        %783 = vmatpush1.bf16.msra.mxu0 0
        %784 = vmatprep.subr.bf16.mxu0 0
        %785 = vmatpush1.bf16.msra.mxu0 0
        %786 = vmatprep.subr.bf16.mxu0 0
        %787 = vmatpush1.bf16.msra.mxu0 0
        %788 = vmatprep.subr.bf16.mxu0 0
        %789 = vmatpush1.bf16.msra.mxu0 0
        %790 = vmatprep.subr.bf16.mxu0 0
        %791 = vmatpush1.bf16.msra.mxu0 0
        %792 = vmatprep.mubr.bf16.mxu0 0
        %793 = vmatmul.mubr.bf16.gmra.mrb[0].mxu0 %v749
        %v794 = vpop.f32.mrb[0].mxu0
        %v795 = vadd.f32 %v690, %v794
        %v796 = vpop.f32.mrb[0].mxu0
        %v797 = vadd.f32 %v690, %v796
        %v798 = vpop.f32.mrb[0].mxu0
        %v799 = vadd.f32 %v695, %v798
        %v800 = vpop.f32.mrb[0].mxu0
        %v801 = vadd.f32 %v695, %v800
        %802 = vmatprep.mubr.bf16.mxu0 0
        %803 = vmatmul.mubr.bf16.gmra.mrb[0].mxu0 %v752
        %v804 = vpop.f32.mrb[0].mxu0
        %v805 = vadd.f32 %v700, %v804
        %v806 = vpop.f32.mrb[0].mxu0
        %v807 = vadd.f32 %v700, %v806
        %v808 = vpop.f32.mrb[0].mxu0
        %v809 = vadd.f32 %v705, %v808
        %v810 = vpop.f32.mrb[0].mxu0
        %v811 = vadd.f32 %v705, %v810
        %812 = vmatprep.mubr.bf16.mxu0 0
        %813 = vmatmul.mubr.bf16.gmra.mrb[0].mxu0 %v755
        %v814 = vpop.f32.mrb[0].mxu0
        %v815 = vadd.f32 %v710, %v814
        %v816 = vpop.f32.mrb[0].mxu0
        %v817 = vadd.f32 %v710, %v816
        %v818 = vpop.f32.mrb[0].mxu0
        %v819 = vadd.f32 %v715, %v818
        %v820 = vpop.f32.mrb[0].mxu0
        %v821 = vadd.f32 %v715, %v820
        %822 = vmatprep.mubr.bf16.mxu0 0
        %823 = vmatmul.mubr.bf16.gmra.mrb[0].mxu0 %v758
        %v824 = vpop.f32.mrb[0].mxu0
        %v825 = vadd.f32 %v720, %v824
        %v826 = vpop.f32.mrb[0].mxu0
        %v827 = vadd.f32 %v720, %v826
        %v828 = vpop.f32.mrb[0].mxu0
        %v829 = vadd.f32 %v725, %v828
        %v830 = vpop.f32.mrb[0].mxu0
        %v831 = vadd.f32 %v725, %v830
        %832 = vdwg.mxu0
        %v833 = vpack.c.bf16 %v799, %v795
        %v834 = vpack.c.bf16 %v801, %v797
        %v835 = vpack.c.bf16 %v809, %v805
        %v836 = vpack.c.bf16 %v811, %v807
        %v837 = vpack.c.bf16 %v819, %v815
        %v838 = vpack.c.bf16 %v821, %v817
        %v839 = vpack.c.bf16 %v829, %v825
        %v840 = vpack.c.bf16 %v831, %v827
        %v849 = vunpack.c.l.b16 %v833
        %v850 = vunpack.c.l.b16 %v834
        %v851 = vunpack.c.h.b16 %v833
        %v852 = vunpack.c.h.b16 %v834
        %v853 = vunpack.c.l.b16 %v835
        %v854 = vunpack.c.l.b16 %v836
        %v855 = vunpack.c.h.b16 %v835
        %v856 = vunpack.c.h.b16 %v836
        %v857 = vunpack.c.l.b16 %v837
        %v858 = vunpack.c.l.b16 %v838
        %v859 = vunpack.c.h.b16 %v837
        %v860 = vunpack.c.h.b16 %v838
        %v861 = vunpack.c.l.b16 %v839
        %v862 = vunpack.c.l.b16 %v840
        %v863 = vunpack.c.h.b16 %v839
        %v864 = vunpack.c.h.b16 %v840
        %v865 = vpack.c.b16 %v850, %v849
        %v866 = vpack.c.b16 %v852, %v851
        %v867 = vpack.c.b16 %v854, %v853
        %v868 = vpack.c.b16 %v856, %v855
        %v869 = vpack.c.b16 %v858, %v857
        %v870 = vpack.c.b16 %v860, %v859
        %v871 = vpack.c.b16 %v862, %v861
        %v872 = vpack.c.b16 %v864, %v863
        %881 = vst [vmem:[%s465] sm:$0xff] %v865
        %882 = vst [vmem:[%s465 + $0x8] sm:$0xff] %v866
        %883 = vst [vmem:[%s465 + $0x10] sm:$0xff] %v867
        %884 = vst [vmem:[%s465 + $0x18] sm:$0xff] %v868
        %885 = vst [vmem:[%s465 + $0x20] sm:$0xff] %v869
        %886 = vst [vmem:[%s465 + $0x28] sm:$0xff] %v870
        %887 = vst [vmem:[%s465 + $0x30] sm:$0xff] %v871
        %888 = vst [vmem:[%s465 + $0x38] sm:$0xff] %v872
        %889 = vxpose.xlu0.c.b16.start [1/8] %v663, 128
        %890 = vxpose.xlu0.c.b16.cont [2/8] %v665, 128
        %891 = vxpose.xlu0.c.b16.cont [3/8] %v667, 128
        %892 = vxpose.xlu0.c.b16.cont [4/8] %v669, 128
        %893 = vxpose.xlu0.c.b16.cont [5/8] 0, 128
        %894 = vxpose.xlu0.c.b16.cont [6/8] 0, 128
        %895 = vxpose.xlu0.c.b16.cont [7/8] 0, 128
        %896 = vxpose.xlu0.c.b16.end [8/8] 0, 128
        %v897 = vpop.trf.xlu0
        %v898 = vpop.trf.xlu0
        %v899 = vpop.trf.xlu0
        %v900 = vpop.trf.xlu0
        %v901 = vpop.trf.xlu0
        %v902 = vpop.trf.xlu0
        %v903 = vpop.trf.xlu0
        %v904 = vpop.trf.xlu0
        %905 = vxpose.xlu0.c.b16.start [1/8] %v664, 128
        %906 = vxpose.xlu0.c.b16.cont [2/8] %v666, 128
        %907 = vxpose.xlu0.c.b16.cont [3/8] %v668, 128
        %908 = vxpose.xlu0.c.b16.cont [4/8] %v670, 128
        %909 = vxpose.xlu0.c.b16.cont [5/8] 0, 128
        %910 = vxpose.xlu0.c.b16.cont [6/8] 0, 128
        %911 = vxpose.xlu0.c.b16.cont [7/8] 0, 128
        %912 = vxpose.xlu0.c.b16.end [8/8] 0, 128
        %v913 = vpop.trf.xlu0
        %v914 = vpop.trf.xlu0
        %v915 = vpop.trf.xlu0
        %v916 = vpop.trf.xlu0
        %v917 = vpop.trf.xlu0
        %v918 = vpop.trf.xlu0
        %v919 = vpop.trf.xlu0
        %v920 = vpop.trf.xlu0
        %v921 = vld [vmem:[%s3] sm:$0xf]
        %v922 = vld [vmem:[%s3 + $0x4] sm:$0xf]
        %v923 = vld [vmem:[%s3 + $0x8] sm:$0xf]
        %v924 = vld [vmem:[%s3 + $0xc] sm:$0xf]
        %v925 = vld [vmem:[%s3 + $0x10] sm:$0xf]
        %v926 = vld [vmem:[%s3 + $0x14] sm:$0xf]
        %v927 = vld [vmem:[%s3 + $0x18] sm:$0xf]
        %v928 = vld [vmem:[%s3 + $0x1c] sm:$0xf]
        %v929 = vld [vmem:[%s4] sm:$0x1]
        %v931 = vlaneseq
        %v932 = vshrl.u32 %v931, 7
        %v933 = vsub.s32 0, %v932
        %v934 = vrot.slane %v929, %v933
        %v944 = vunpack.c.l.b16 %v921
        %v945 = vunpack.c.l.b16 %v922
        %v946 = vunpack.c.l.b16 %v923
        %v947 = vunpack.c.l.b16 %v924
        %v948 = vunpack.c.l.b16 %v925
        %v949 = vunpack.c.l.b16 %v926
        %v950 = vunpack.c.l.b16 %v927
        %v951 = vunpack.c.l.b16 %v928
        %v952 = vpack.c.b16 %v945, %v944
        %v953 = vpack.c.b16 %v947, %v946
        %v954 = vpack.c.b16 %v949, %v948
        %v955 = vpack.c.b16 %v951, %v950
        %v961 = vsel %vm747, %v897, 0
        %v964 = vsel %vm747, %v898, 0
        %v967 = vsel %vm747, %v899, 0
        %v970 = vsel %vm747, %v900, 0
        %v973 = vsel %vm747, %v901, 0
        %v976 = vsel %vm747, %v902, 0
        %v979 = vsel %vm747, %v903, 0
        %v982 = vsel %vm747, %v904, 0
        %v985 = vsel %vm747, %v913, 0
        %v988 = vsel %vm747, %v914, 0
        %v991 = vsel %vm747, %v915, 0
        %v994 = vsel %vm747, %v916, 0
        %v997 = vsel %vm747, %v917, 0
        %v1000 = vsel %vm747, %v918, 0
        %v1003 = vsel %vm747, %v919, 0
        %v1006 = vsel %vm747, %v920, 0
        %1008 = vmatprep.subr.bf16.mxu0 0
        %1009 = vmatpush1.bf16.msra.mxu0 %v952
        %1010 = vmatprep.subr.bf16.mxu0 0
        %1011 = vmatpush1.bf16.msra.mxu0 %v953
        %1012 = vmatprep.subr.bf16.mxu0 0
        %1013 = vmatpush1.bf16.msra.mxu0 %v954
        %1014 = vmatprep.subr.bf16.mxu0 0
        %1015 = vmatpush1.bf16.msra.mxu0 %v955
        %1016 = vmatprep.subr.bf16.mxu0 0
        %1017 = vmatpush1.bf16.msra.mxu0 0
        %1018 = vmatprep.subr.bf16.mxu0 0
        %1019 = vmatpush1.bf16.msra.mxu0 0
        %1020 = vmatprep.subr.bf16.mxu0 0
        %1021 = vmatpush1.bf16.msra.mxu0 0
        %1022 = vmatprep.subr.bf16.mxu0 0
        %1023 = vmatpush1.bf16.msra.mxu0 0
        %1024 = vmatprep.subr.bf16.mxu0 0
        %1025 = vmatpush1.bf16.msra.mxu0 0
        %1026 = vmatprep.subr.bf16.mxu0 0
        %1027 = vmatpush1.bf16.msra.mxu0 0
        %1028 = vmatprep.subr.bf16.mxu0 0
        %1029 = vmatpush1.bf16.msra.mxu0 0
        %1030 = vmatprep.subr.bf16.mxu0 0
        %1031 = vmatpush1.bf16.msra.mxu0 0
        %1032 = vmatprep.subr.bf16.mxu0 0
        %1033 = vmatpush1.bf16.msra.mxu0 0
        %1034 = vmatprep.subr.bf16.mxu0 0
        %1035 = vmatpush1.bf16.msra.mxu0 0
        %1036 = vmatprep.subr.bf16.mxu0 0
        %1037 = vmatpush1.bf16.msra.mxu0 0
        %1038 = vmatprep.subr.bf16.mxu0 0
        %1039 = vmatpush1.bf16.msra.mxu0 0
        %1040 = vmatprep.mubr.bf16.mxu0 0
        %1041 = vmatmul.mubr.bf16.gmra.mrb[0].mxu0 %v961
        %v1042 = vpop.f32.mrb[0].mxu0
        %v1043 = vadd.f32 %v934, %v1042
        %v1044 = vpop.f32.mrb[0].mxu0
        %v1045 = vpop.f32.mrb[0].mxu0
        %v1046 = vadd.f32 %v934, %v1045
        %v1047 = vpop.f32.mrb[0].mxu0
        %1048 = vmatprep.mubr.bf16.mxu0 0
        %1049 = vmatmul.mubr.bf16.gmra.mrb[0].mxu0 %v964
        %v1050 = vpop.f32.mrb[0].mxu0
        %v1051 = vadd.f32 %v934, %v1050
        %v1052 = vpop.f32.mrb[0].mxu0
        %v1053 = vpop.f32.mrb[0].mxu0
        %v1054 = vadd.f32 %v934, %v1053
        %v1055 = vpop.f32.mrb[0].mxu0
        %1056 = vmatprep.mubr.bf16.mxu0 0
        %1057 = vmatmul.mubr.bf16.gmra.mrb[0].mxu0 %v967
        %v1058 = vpop.f32.mrb[0].mxu0
        %v1059 = vadd.f32 %v934, %v1058
        %v1060 = vpop.f32.mrb[0].mxu0
        %v1061 = vpop.f32.mrb[0].mxu0
        %v1062 = vadd.f32 %v934, %v1061
        %v1063 = vpop.f32.mrb[0].mxu0
        %1064 = vmatprep.mubr.bf16.mxu0 0
        %1065 = vmatmul.mubr.bf16.gmra.mrb[0].mxu0 %v970
        %v1066 = vpop.f32.mrb[0].mxu0
        %v1067 = vadd.f32 %v934, %v1066
        %v1068 = vpop.f32.mrb[0].mxu0
        %v1069 = vpop.f32.mrb[0].mxu0
        %v1070 = vadd.f32 %v934, %v1069
        %v1071 = vpop.f32.mrb[0].mxu0
        %1072 = vmatprep.mubr.bf16.mxu0 0
        %1073 = vmatmul.mubr.bf16.gmra.mrb[0].mxu0 %v973
        %v1074 = vpop.f32.mrb[0].mxu0
        %v1075 = vadd.f32 %v934, %v1074
        %v1076 = vpop.f32.mrb[0].mxu0
        %v1077 = vpop.f32.mrb[0].mxu0
        %v1078 = vadd.f32 %v934, %v1077
        %v1079 = vpop.f32.mrb[0].mxu0
        %1080 = vmatprep.mubr.bf16.mxu0 0
        %1081 = vmatmul.mubr.bf16.gmra.mrb[0].mxu0 %v976
        %v1082 = vpop.f32.mrb[0].mxu0
        %v1083 = vadd.f32 %v934, %v1082
        %v1084 = vpop.f32.mrb[0].mxu0
        %v1085 = vpop.f32.mrb[0].mxu0
        %v1086 = vadd.f32 %v934, %v1085
        %v1087 = vpop.f32.mrb[0].mxu0
        %1088 = vmatprep.mubr.bf16.mxu0 0
        %1089 = vmatmul.mubr.bf16.gmra.mrb[0].mxu0 %v979
        %v1090 = vpop.f32.mrb[0].mxu0
        %v1091 = vadd.f32 %v934, %v1090
        %v1092 = vpop.f32.mrb[0].mxu0
        %v1093 = vpop.f32.mrb[0].mxu0
        %v1094 = vadd.f32 %v934, %v1093
        %v1095 = vpop.f32.mrb[0].mxu0
        %1096 = vmatprep.mubr.bf16.mxu0 0
        %1097 = vmatmul.mubr.bf16.gmra.mrb[0].mxu0 %v982
        %v1098 = vpop.f32.mrb[0].mxu0
        %v1099 = vadd.f32 %v934, %v1098
        %v1100 = vpop.f32.mrb[0].mxu0
        %v1101 = vpop.f32.mrb[0].mxu0
        %v1102 = vadd.f32 %v934, %v1101
        %v1103 = vpop.f32.mrb[0].mxu0
        %1104 = vmatprep.mubr.bf16.mxu0 0
        %1105 = vmatmul.mubr.bf16.gmra.mrb[0].mxu0 %v985
        %v1106 = vpop.f32.mrb[0].mxu0
        %v1107 = vadd.f32 %v934, %v1106
        %v1108 = vpop.f32.mrb[0].mxu0
        %v1109 = vpop.f32.mrb[0].mxu0
        %v1110 = vadd.f32 %v934, %v1109
        %v1111 = vpop.f32.mrb[0].mxu0
        %1112 = vmatprep.mubr.bf16.mxu0 0
        %1113 = vmatmul.mubr.bf16.gmra.mrb[0].mxu0 %v988
        %v1114 = vpop.f32.mrb[0].mxu0
        %v1115 = vadd.f32 %v934, %v1114
        %v1116 = vpop.f32.mrb[0].mxu0
        %v1117 = vpop.f32.mrb[0].mxu0
        %v1118 = vadd.f32 %v934, %v1117
        %v1119 = vpop.f32.mrb[0].mxu0
        %1120 = vmatprep.mubr.bf16.mxu0 0
        %1121 = vmatmul.mubr.bf16.gmra.mrb[0].mxu0 %v991
        %v1122 = vpop.f32.mrb[0].mxu0
        %v1123 = vadd.f32 %v934, %v1122
        %v1124 = vpop.f32.mrb[0].mxu0
        %v1125 = vpop.f32.mrb[0].mxu0
        %v1126 = vadd.f32 %v934, %v1125
        %v1127 = vpop.f32.mrb[0].mxu0
        %1128 = vmatprep.mubr.bf16.mxu0 0
        %1129 = vmatmul.mubr.bf16.gmra.mrb[0].mxu0 %v994
        %v1130 = vpop.f32.mrb[0].mxu0
        %v1131 = vadd.f32 %v934, %v1130
        %v1132 = vpop.f32.mrb[0].mxu0
        %v1133 = vpop.f32.mrb[0].mxu0
        %v1134 = vadd.f32 %v934, %v1133
        %v1135 = vpop.f32.mrb[0].mxu0
        %1136 = vmatprep.mubr.bf16.mxu0 0
        %1137 = vmatmul.mubr.bf16.gmra.mrb[0].mxu0 %v997
        %v1138 = vpop.f32.mrb[0].mxu0
        %v1139 = vadd.f32 %v934, %v1138
        %v1140 = vpop.f32.mrb[0].mxu0
        %v1141 = vpop.f32.mrb[0].mxu0
        %v1142 = vadd.f32 %v934, %v1141
        %v1143 = vpop.f32.mrb[0].mxu0
        %1144 = vmatprep.mubr.bf16.mxu0 0
        %1145 = vmatmul.mubr.bf16.gmra.mrb[0].mxu0 %v1000
        %v1146 = vpop.f32.mrb[0].mxu0
        %v1147 = vadd.f32 %v934, %v1146
        %v1148 = vpop.f32.mrb[0].mxu0
        %v1149 = vpop.f32.mrb[0].mxu0
        %v1150 = vadd.f32 %v934, %v1149
        %v1151 = vpop.f32.mrb[0].mxu0
        %1152 = vmatprep.mubr.bf16.mxu0 0
        %1153 = vmatmul.mubr.bf16.gmra.mrb[0].mxu0 %v1003
        %v1154 = vpop.f32.mrb[0].mxu0
        %v1155 = vadd.f32 %v934, %v1154
        %v1156 = vpop.f32.mrb[0].mxu0
        %v1157 = vpop.f32.mrb[0].mxu0
        %v1158 = vadd.f32 %v934, %v1157
        %v1159 = vpop.f32.mrb[0].mxu0
        %1160 = vmatprep.mubr.bf16.mxu0 0
        %1161 = vmatmul.mubr.bf16.gmra.mrb[0].mxu0 %v1006
        %v1162 = vpop.f32.mrb[0].mxu0
        %v1163 = vadd.f32 %v934, %v1162
        %v1164 = vpop.f32.mrb[0].mxu0
        %v1165 = vpop.f32.mrb[0].mxu0
        %v1166 = vadd.f32 %v934, %v1165
        %v1167 = vpop.f32.mrb[0].mxu0
        %1168 = vdwg.mxu0
        %v1169 = vpack.c.bf16 %v1046, %v1043
        %v1170 = vpack.c.bf16 %v1054, %v1051
        %v1171 = vpack.c.bf16 %v1062, %v1059
        %v1172 = vpack.c.bf16 %v1070, %v1067
        %v1173 = vpack.c.bf16 %v1078, %v1075
        %v1174 = vpack.c.bf16 %v1086, %v1083
        %v1175 = vpack.c.bf16 %v1094, %v1091
        %v1176 = vpack.c.bf16 %v1102, %v1099
        %v1177 = vpack.c.bf16 %v1110, %v1107
        %v1178 = vpack.c.bf16 %v1118, %v1115
        %v1179 = vpack.c.bf16 %v1126, %v1123
        %v1180 = vpack.c.bf16 %v1134, %v1131
        %v1181 = vpack.c.bf16 %v1142, %v1139
        %v1182 = vpack.c.bf16 %v1150, %v1147
        %v1183 = vpack.c.bf16 %v1158, %v1155
        %v1184 = vpack.c.bf16 %v1166, %v1163
        %v1201 = vunpack.c.l.b16 %v1169
        %v1202 = vunpack.c.h.b16 %v1169
        %v1203 = vunpack.c.l.b16 %v1170
        %v1204 = vunpack.c.h.b16 %v1170
        %v1205 = vunpack.c.l.b16 %v1171
        %v1206 = vunpack.c.h.b16 %v1171
        %v1207 = vunpack.c.l.b16 %v1172
        %v1208 = vunpack.c.h.b16 %v1172
        %v1209 = vunpack.c.l.b16 %v1173
        %v1210 = vunpack.c.h.b16 %v1173
        %v1211 = vunpack.c.l.b16 %v1174
        %v1212 = vunpack.c.h.b16 %v1174
        %v1213 = vunpack.c.l.b16 %v1175
        %v1214 = vunpack.c.h.b16 %v1175
        %v1215 = vunpack.c.l.b16 %v1176
        %v1216 = vunpack.c.h.b16 %v1176
        %v1217 = vunpack.c.l.b16 %v1177
        %v1218 = vunpack.c.h.b16 %v1177
        %v1219 = vunpack.c.l.b16 %v1178
        %v1220 = vunpack.c.h.b16 %v1178
        %v1221 = vunpack.c.l.b16 %v1179
        %v1222 = vunpack.c.h.b16 %v1179
        %v1223 = vunpack.c.l.b16 %v1180
        %v1224 = vunpack.c.h.b16 %v1180
        %v1225 = vunpack.c.l.b16 %v1181
        %v1226 = vunpack.c.h.b16 %v1181
        %v1227 = vunpack.c.l.b16 %v1182
        %v1228 = vunpack.c.h.b16 %v1182
        %v1229 = vunpack.c.l.b16 %v1183
        %v1230 = vunpack.c.h.b16 %v1183
        %v1231 = vunpack.c.l.b16 %v1184
        %v1232 = vunpack.c.h.b16 %v1184
        %v1233 = vpack.c.b16 %v1201, %v1201
        %v1234 = vpack.c.b16 %v1202, %v1202
        %v1235 = vpack.c.b16 %v1203, %v1203
        %v1236 = vpack.c.b16 %v1204, %v1204
        %v1237 = vpack.c.b16 %v1205, %v1205
        %v1238 = vpack.c.b16 %v1206, %v1206
        %v1239 = vpack.c.b16 %v1207, %v1207
        %v1240 = vpack.c.b16 %v1208, %v1208
        %v1241 = vpack.c.b16 %v1209, %v1209
        %v1242 = vpack.c.b16 %v1210, %v1210
        %v1243 = vpack.c.b16 %v1211, %v1211
        %v1244 = vpack.c.b16 %v1212, %v1212
        %v1245 = vpack.c.b16 %v1213, %v1213
        %v1246 = vpack.c.b16 %v1214, %v1214
        %v1247 = vpack.c.b16 %v1215, %v1215
        %v1248 = vpack.c.b16 %v1216, %v1216
        %v1249 = vpack.c.b16 %v1217, %v1217
        %v1250 = vpack.c.b16 %v1218, %v1218
        %v1251 = vpack.c.b16 %v1219, %v1219
        %v1252 = vpack.c.b16 %v1220, %v1220
        %v1253 = vpack.c.b16 %v1221, %v1221
        %v1254 = vpack.c.b16 %v1222, %v1222
        %v1255 = vpack.c.b16 %v1223, %v1223
        %v1256 = vpack.c.b16 %v1224, %v1224
        %v1257 = vpack.c.b16 %v1225, %v1225
        %v1258 = vpack.c.b16 %v1226, %v1226
        %v1259 = vpack.c.b16 %v1227, %v1227
        %v1260 = vpack.c.b16 %v1228, %v1228
        %v1261 = vpack.c.b16 %v1229, %v1229
        %v1262 = vpack.c.b16 %v1230, %v1230
        %v1263 = vpack.c.b16 %v1231, %v1231
        %v1264 = vpack.c.b16 %v1232, %v1232
        %vm1297 = vcmask 519168
        %1298 = vst.msk [vmem:[%s505] sm:$0xf] %vm1297, %v1233
        %1299 = vst.msk [vmem:[%s505 + $0x4] sm:$0xf] %vm1297, %v1234
        %1300 = vst.msk [vmem:[%s505 + $0x8] sm:$0xf] %vm1297, %v1235
        %1301 = vst.msk [vmem:[%s505 + $0xc] sm:$0xf] %vm1297, %v1236
        %1302 = vst.msk [vmem:[%s505 + $0x10] sm:$0xf] %vm1297, %v1237
        %1303 = vst.msk [vmem:[%s505 + $0x14] sm:$0xf] %vm1297, %v1238
        %1304 = vst.msk [vmem:[%s505 + $0x18] sm:$0xf] %vm1297, %v1239
        %1305 = vst.msk [vmem:[%s505 + $0x1c] sm:$0xf] %vm1297, %v1240
        %1306 = vst.msk [vmem:[%s505 + $0x20] sm:$0xf] %vm1297, %v1241
        %1307 = vst.msk [vmem:[%s505 + $0x24] sm:$0xf] %vm1297, %v1242
        %1308 = vst.msk [vmem:[%s505 + $0x28] sm:$0xf] %vm1297, %v1243
        %1309 = vst.msk [vmem:[%s505 + $0x2c] sm:$0xf] %vm1297, %v1244
        %1310 = vst.msk [vmem:[%s505 + $0x30] sm:$0xf] %vm1297, %v1245
        %1311 = vst.msk [vmem:[%s505 + $0x34] sm:$0xf] %vm1297, %v1246
        %1312 = vst.msk [vmem:[%s505 + $0x38] sm:$0xf] %vm1297, %v1247
        %1313 = vst.msk [vmem:[%s505 + $0x3c] sm:$0xf] %vm1297, %v1248
        %1314 = vst.msk [vmem:[%s505 + $0x40] sm:$0xf] %vm1297, %v1249
        %1315 = vst.msk [vmem:[%s505 + $0x44] sm:$0xf] %vm1297, %v1250
        %1316 = vst.msk [vmem:[%s505 + $0x48] sm:$0xf] %vm1297, %v1251
        %1317 = vst.msk [vmem:[%s505 + $0x4c] sm:$0xf] %vm1297, %v1252
        %1318 = vst.msk [vmem:[%s505 + $0x50] sm:$0xf] %vm1297, %v1253
        %1319 = vst.msk [vmem:[%s505 + $0x54] sm:$0xf] %vm1297, %v1254
        %1320 = vst.msk [vmem:[%s505 + $0x58] sm:$0xf] %vm1297, %v1255
        %1321 = vst.msk [vmem:[%s505 + $0x5c] sm:$0xf] %vm1297, %v1256
        %1322 = vst.msk [vmem:[%s505 + $0x60] sm:$0xf] %vm1297, %v1257
        %1323 = vst.msk [vmem:[%s505 + $0x64] sm:$0xf] %vm1297, %v1258
        %1324 = vst.msk [vmem:[%s505 + $0x68] sm:$0xf] %vm1297, %v1259
        %1325 = vst.msk [vmem:[%s505 + $0x6c] sm:$0xf] %vm1297, %v1260
        %1326 = vst.msk [vmem:[%s505 + $0x70] sm:$0xf] %vm1297, %v1261
        %1327 = vst.msk [vmem:[%s505 + $0x74] sm:$0xf] %vm1297, %v1262
        %1328 = vst.msk [vmem:[%s505 + $0x78] sm:$0xf] %vm1297, %v1263
        %1329 = vst.msk [vmem:[%s505 + $0x7c] sm:$0xf] %vm1297, %v1264
        %v1330 = vld [vmem:[#allocation2] sm:$0xf]
        %v1331 = vld [vmem:[#allocation2 + $0x4] sm:$0xf]
        %v1332 = vld [vmem:[#allocation2 + $0x8] sm:$0xf]
        %v1333 = vld [vmem:[#allocation2 + $0xc] sm:$0xf]
        %v1334 = vld [vmem:[#allocation2 + $0x10] sm:$0xf]
        %v1335 = vld [vmem:[#allocation2 + $0x14] sm:$0xf]
        %v1336 = vld [vmem:[#allocation2 + $0x18] sm:$0xf]
        %v1337 = vld [vmem:[#allocation2 + $0x1c] sm:$0xf]
        %v1338 = vld [vmem:[%s8] sm:$0x1]
        %v1340 = vlaneseq
        %v1341 = vshrl.u32 %v1340, 7
        %v1342 = vsub.s32 0, %v1341
        %v1343 = vrot.slane %v1338, %v1342
        %v1353 = vunpack.c.l.b16 %v1330
        %v1354 = vunpack.c.l.b16 %v1331
        %v1355 = vunpack.c.l.b16 %v1332
        %v1356 = vunpack.c.l.b16 %v1333
        %v1357 = vunpack.c.l.b16 %v1334
        %v1358 = vunpack.c.l.b16 %v1335
        %v1359 = vunpack.c.l.b16 %v1336
        %v1360 = vunpack.c.l.b16 %v1337
        %v1361 = vpack.c.b16 %v1354, %v1353
        %v1362 = vpack.c.b16 %v1356, %v1355
        %v1363 = vpack.c.b16 %v1358, %v1357
        %v1364 = vpack.c.b16 %v1360, %v1359
        %1369 = vmatprep.subr.bf16.mxu0 0
        %1370 = vmatpush1.bf16.msra.mxu0 %v1361
        %1371 = vmatprep.subr.bf16.mxu0 0
        %1372 = vmatpush1.bf16.msra.mxu0 %v1362
        %1373 = vmatprep.subr.bf16.mxu0 0
        %1374 = vmatpush1.bf16.msra.mxu0 %v1363
        %1375 = vmatprep.subr.bf16.mxu0 0
        %1376 = vmatpush1.bf16.msra.mxu0 %v1364
        %1377 = vmatprep.subr.bf16.mxu0 0
        %1378 = vmatpush1.bf16.msra.mxu0 0
        %1379 = vmatprep.subr.bf16.mxu0 0
        %1380 = vmatpush1.bf16.msra.mxu0 0
        %1381 = vmatprep.subr.bf16.mxu0 0
        %1382 = vmatpush1.bf16.msra.mxu0 0
        %1383 = vmatprep.subr.bf16.mxu0 0
        %1384 = vmatpush1.bf16.msra.mxu0 0
        %1385 = vmatprep.subr.bf16.mxu0 0
        %1386 = vmatpush1.bf16.msra.mxu0 0
        %1387 = vmatprep.subr.bf16.mxu0 0
        %1388 = vmatpush1.bf16.msra.mxu0 0
        %1389 = vmatprep.subr.bf16.mxu0 0
        %1390 = vmatpush1.bf16.msra.mxu0 0
        %1391 = vmatprep.subr.bf16.mxu0 0
        %1392 = vmatpush1.bf16.msra.mxu0 0
        %1393 = vmatprep.subr.bf16.mxu0 0
        %1394 = vmatpush1.bf16.msra.mxu0 0
        %1395 = vmatprep.subr.bf16.mxu0 0
        %1396 = vmatpush1.bf16.msra.mxu0 0
        %1397 = vmatprep.subr.bf16.mxu0 0
        %1398 = vmatpush1.bf16.msra.mxu0 0
        %1399 = vmatprep.subr.bf16.mxu0 0
        %1400 = vmatpush1.bf16.msra.mxu0 0
        %1401 = vmatprep.mubr.bf16.mxu0 0
        %1402 = vmatmul.mubr.bf16.gmra.mrb[0].mxu0 %v961
        %v1403 = vpop.f32.mrb[0].mxu0
        %v1404 = vadd.f32 %v1343, %v1403
        %v1405 = vpop.f32.mrb[0].mxu0
        %v1406 = vpop.f32.mrb[0].mxu0
        %v1407 = vadd.f32 %v1343, %v1406
        %v1408 = vpop.f32.mrb[0].mxu0
        %1409 = vmatprep.mubr.bf16.mxu0 0
        %1410 = vmatmul.mubr.bf16.gmra.mrb[0].mxu0 %v964
        %v1411 = vpop.f32.mrb[0].mxu0
        %v1412 = vadd.f32 %v1343, %v1411
        %v1413 = vpop.f32.mrb[0].mxu0
        %v1414 = vpop.f32.mrb[0].mxu0
        %v1415 = vadd.f32 %v1343, %v1414
        %v1416 = vpop.f32.mrb[0].mxu0
        %1417 = vmatprep.mubr.bf16.mxu0 0
        %1418 = vmatmul.mubr.bf16.gmra.mrb[0].mxu0 %v967
        %v1419 = vpop.f32.mrb[0].mxu0
        %v1420 = vadd.f32 %v1343, %v1419
        %v1421 = vpop.f32.mrb[0].mxu0
        %v1422 = vpop.f32.mrb[0].mxu0
        %v1423 = vadd.f32 %v1343, %v1422
        %v1424 = vpop.f32.mrb[0].mxu0
        %1425 = vmatprep.mubr.bf16.mxu0 0
        %1426 = vmatmul.mubr.bf16.gmra.mrb[0].mxu0 %v970
        %v1427 = vpop.f32.mrb[0].mxu0
        %v1428 = vadd.f32 %v1343, %v1427
        %v1429 = vpop.f32.mrb[0].mxu0
        %v1430 = vpop.f32.mrb[0].mxu0
        %v1431 = vadd.f32 %v1343, %v1430
        %v1432 = vpop.f32.mrb[0].mxu0
        %1433 = vmatprep.mubr.bf16.mxu0 0
        %1434 = vmatmul.mubr.bf16.gmra.mrb[0].mxu0 %v973
        %v1435 = vpop.f32.mrb[0].mxu0
        %v1436 = vadd.f32 %v1343, %v1435
        %v1437 = vpop.f32.mrb[0].mxu0
        %v1438 = vpop.f32.mrb[0].mxu0
        %v1439 = vadd.f32 %v1343, %v1438
        %v1440 = vpop.f32.mrb[0].mxu0
        %1441 = vmatprep.mubr.bf16.mxu0 0
        %1442 = vmatmul.mubr.bf16.gmra.mrb[0].mxu0 %v976
        %v1443 = vpop.f32.mrb[0].mxu0
        %v1444 = vadd.f32 %v1343, %v1443
        %v1445 = vpop.f32.mrb[0].mxu0
        %v1446 = vpop.f32.mrb[0].mxu0
        %v1447 = vadd.f32 %v1343, %v1446
        %v1448 = vpop.f32.mrb[0].mxu0
        %1449 = vmatprep.mubr.bf16.mxu0 0
        %1450 = vmatmul.mubr.bf16.gmra.mrb[0].mxu0 %v979
        %v1451 = vpop.f32.mrb[0].mxu0
        %v1452 = vadd.f32 %v1343, %v1451
        %v1453 = vpop.f32.mrb[0].mxu0
        %v1454 = vpop.f32.mrb[0].mxu0
        %v1455 = vadd.f32 %v1343, %v1454
        %v1456 = vpop.f32.mrb[0].mxu0
        %1457 = vmatprep.mubr.bf16.mxu0 0
        %1458 = vmatmul.mubr.bf16.gmra.mrb[0].mxu0 %v982
        %v1459 = vpop.f32.mrb[0].mxu0
        %v1460 = vadd.f32 %v1343, %v1459
        %v1461 = vpop.f32.mrb[0].mxu0
        %v1462 = vpop.f32.mrb[0].mxu0
        %v1463 = vadd.f32 %v1343, %v1462
        %v1464 = vpop.f32.mrb[0].mxu0
        %1465 = vmatprep.mubr.bf16.mxu0 0
        %1466 = vmatmul.mubr.bf16.gmra.mrb[0].mxu0 %v985
        %v1467 = vpop.f32.mrb[0].mxu0
        %v1468 = vadd.f32 %v1343, %v1467
        %v1469 = vpop.f32.mrb[0].mxu0
        %v1470 = vpop.f32.mrb[0].mxu0
        %v1471 = vadd.f32 %v1343, %v1470
        %v1472 = vpop.f32.mrb[0].mxu0
        %1473 = vmatprep.mubr.bf16.mxu0 0
        %1474 = vmatmul.mubr.bf16.gmra.mrb[0].mxu0 %v988
        %v1475 = vpop.f32.mrb[0].mxu0
        %v1476 = vadd.f32 %v1343, %v1475
        %v1477 = vpop.f32.mrb[0].mxu0
        %v1478 = vpop.f32.mrb[0].mxu0
        %v1479 = vadd.f32 %v1343, %v1478
        %v1480 = vpop.f32.mrb[0].mxu0
        %1481 = vmatprep.mubr.bf16.mxu0 0
        %1482 = vmatmul.mubr.bf16.gmra.mrb[0].mxu0 %v991
        %v1483 = vpop.f32.mrb[0].mxu0
        %v1484 = vadd.f32 %v1343, %v1483
        %v1485 = vpop.f32.mrb[0].mxu0
        %v1486 = vpop.f32.mrb[0].mxu0
        %v1487 = vadd.f32 %v1343, %v1486
        %v1488 = vpop.f32.mrb[0].mxu0
        %1489 = vmatprep.mubr.bf16.mxu0 0
        %1490 = vmatmul.mubr.bf16.gmra.mrb[0].mxu0 %v994
        %v1491 = vpop.f32.mrb[0].mxu0
        %v1492 = vadd.f32 %v1343, %v1491
        %v1493 = vpop.f32.mrb[0].mxu0
        %v1494 = vpop.f32.mrb[0].mxu0
        %v1495 = vadd.f32 %v1343, %v1494
        %v1496 = vpop.f32.mrb[0].mxu0
        %1497 = vmatprep.mubr.bf16.mxu0 0
        %1498 = vmatmul.mubr.bf16.gmra.mrb[0].mxu0 %v997
        %v1499 = vpop.f32.mrb[0].mxu0
        %v1500 = vadd.f32 %v1343, %v1499
        %v1501 = vpop.f32.mrb[0].mxu0
        %v1502 = vpop.f32.mrb[0].mxu0
        %v1503 = vadd.f32 %v1343, %v1502
        %v1504 = vpop.f32.mrb[0].mxu0
        %1505 = vmatprep.mubr.bf16.mxu0 0
        %1506 = vmatmul.mubr.bf16.gmra.mrb[0].mxu0 %v1000
        %v1507 = vpop.f32.mrb[0].mxu0
        %v1508 = vadd.f32 %v1343, %v1507
        %v1509 = vpop.f32.mrb[0].mxu0
        %v1510 = vpop.f32.mrb[0].mxu0
        %v1511 = vadd.f32 %v1343, %v1510
        %v1512 = vpop.f32.mrb[0].mxu0
        %1513 = vmatprep.mubr.bf16.mxu0 0
        %1514 = vmatmul.mubr.bf16.gmra.mrb[0].mxu0 %v1003
        %v1515 = vpop.f32.mrb[0].mxu0
        %v1516 = vadd.f32 %v1343, %v1515
        %v1517 = vpop.f32.mrb[0].mxu0
        %v1518 = vpop.f32.mrb[0].mxu0
        %v1519 = vadd.f32 %v1343, %v1518
        %v1520 = vpop.f32.mrb[0].mxu0
        %1521 = vmatprep.mubr.bf16.mxu0 0
        %1522 = vmatmul.mubr.bf16.gmra.mrb[0].mxu0 %v1006
        %v1523 = vpop.f32.mrb[0].mxu0
        %v1524 = vadd.f32 %v1343, %v1523
        %v1525 = vpop.f32.mrb[0].mxu0
        %v1526 = vpop.f32.mrb[0].mxu0
        %v1527 = vadd.f32 %v1343, %v1526
        %v1528 = vpop.f32.mrb[0].mxu0
        %1529 = vdwg.mxu0
        %v1530 = vpack.c.bf16 %v1407, %v1404
        %v1531 = vpack.c.bf16 %v1415, %v1412
        %v1532 = vpack.c.bf16 %v1423, %v1420
        %v1533 = vpack.c.bf16 %v1431, %v1428
        %v1534 = vpack.c.bf16 %v1439, %v1436
        %v1535 = vpack.c.bf16 %v1447, %v1444
        %v1536 = vpack.c.bf16 %v1455, %v1452
        %v1537 = vpack.c.bf16 %v1463, %v1460
        %v1538 = vpack.c.bf16 %v1471, %v1468
        %v1539 = vpack.c.bf16 %v1479, %v1476
        %v1540 = vpack.c.bf16 %v1487, %v1484
        %v1541 = vpack.c.bf16 %v1495, %v1492
        %v1542 = vpack.c.bf16 %v1503, %v1500
        %v1543 = vpack.c.bf16 %v1511, %v1508
        %v1544 = vpack.c.bf16 %v1519, %v1516
        %v1545 = vpack.c.bf16 %v1527, %v1524
        %v1562 = vunpack.c.l.b16 %v1530
        %v1563 = vunpack.c.h.b16 %v1530
        %v1564 = vunpack.c.l.b16 %v1531
        %v1565 = vunpack.c.h.b16 %v1531
        %v1566 = vunpack.c.l.b16 %v1532
        %v1567 = vunpack.c.h.b16 %v1532
        %v1568 = vunpack.c.l.b16 %v1533
        %v1569 = vunpack.c.h.b16 %v1533
        %v1570 = vunpack.c.l.b16 %v1534
        %v1571 = vunpack.c.h.b16 %v1534
        %v1572 = vunpack.c.l.b16 %v1535
        %v1573 = vunpack.c.h.b16 %v1535
        %v1574 = vunpack.c.l.b16 %v1536
        %v1575 = vunpack.c.h.b16 %v1536
        %v1576 = vunpack.c.l.b16 %v1537
        %v1577 = vunpack.c.h.b16 %v1537
        %v1578 = vunpack.c.l.b16 %v1538
        %v1579 = vunpack.c.h.b16 %v1538
        %v1580 = vunpack.c.l.b16 %v1539
        %v1581 = vunpack.c.h.b16 %v1539
        %v1582 = vunpack.c.l.b16 %v1540
        %v1583 = vunpack.c.h.b16 %v1540
        %v1584 = vunpack.c.l.b16 %v1541
        %v1585 = vunpack.c.h.b16 %v1541
        %v1586 = vunpack.c.l.b16 %v1542
        %v1587 = vunpack.c.h.b16 %v1542
        %v1588 = vunpack.c.l.b16 %v1543
        %v1589 = vunpack.c.h.b16 %v1543
        %v1590 = vunpack.c.l.b16 %v1544
        %v1591 = vunpack.c.h.b16 %v1544
        %v1592 = vunpack.c.l.b16 %v1545
        %v1593 = vunpack.c.h.b16 %v1545
        %v1594 = vpack.c.b16 %v1562, %v1562
        %v1595 = vpack.c.b16 %v1563, %v1563
        %v1596 = vpack.c.b16 %v1564, %v1564
        %v1597 = vpack.c.b16 %v1565, %v1565
        %v1598 = vpack.c.b16 %v1566, %v1566
        %v1599 = vpack.c.b16 %v1567, %v1567
        %v1600 = vpack.c.b16 %v1568, %v1568
        %v1601 = vpack.c.b16 %v1569, %v1569
        %v1602 = vpack.c.b16 %v1570, %v1570
        %v1603 = vpack.c.b16 %v1571, %v1571
        %v1604 = vpack.c.b16 %v1572, %v1572
        %v1605 = vpack.c.b16 %v1573, %v1573
        %v1606 = vpack.c.b16 %v1574, %v1574
        %v1607 = vpack.c.b16 %v1575, %v1575
        %v1608 = vpack.c.b16 %v1576, %v1576
        %v1609 = vpack.c.b16 %v1577, %v1577
        %v1610 = vpack.c.b16 %v1578, %v1578
        %v1611 = vpack.c.b16 %v1579, %v1579
        %v1612 = vpack.c.b16 %v1580, %v1580
        %v1613 = vpack.c.b16 %v1581, %v1581
        %v1614 = vpack.c.b16 %v1582, %v1582
        %v1615 = vpack.c.b16 %v1583, %v1583
        %v1616 = vpack.c.b16 %v1584, %v1584
        %v1617 = vpack.c.b16 %v1585, %v1585
        %v1618 = vpack.c.b16 %v1586, %v1586
        %v1619 = vpack.c.b16 %v1587, %v1587
        %v1620 = vpack.c.b16 %v1588, %v1588
        %v1621 = vpack.c.b16 %v1589, %v1589
        %v1622 = vpack.c.b16 %v1590, %v1590
        %v1623 = vpack.c.b16 %v1591, %v1591
        %v1624 = vpack.c.b16 %v1592, %v1592
        %v1625 = vpack.c.b16 %v1593, %v1593
        %1658 = vst.msk [vmem:[%s516] sm:$0xf] %vm1297, %v1594
        %1659 = vst.msk [vmem:[%s516 + $0x4] sm:$0xf] %vm1297, %v1595
        %1660 = vst.msk [vmem:[%s516 + $0x8] sm:$0xf] %vm1297, %v1596
        %1661 = vst.msk [vmem:[%s516 + $0xc] sm:$0xf] %vm1297, %v1597
        %1662 = vst.msk [vmem:[%s516 + $0x10] sm:$0xf] %vm1297, %v1598
        %1663 = vst.msk [vmem:[%s516 + $0x14] sm:$0xf] %vm1297, %v1599
        %1664 = vst.msk [vmem:[%s516 + $0x18] sm:$0xf] %vm1297, %v1600
        %1665 = vst.msk [vmem:[%s516 + $0x1c] sm:$0xf] %vm1297, %v1601
        %1666 = vst.msk [vmem:[%s516 + $0x20] sm:$0xf] %vm1297, %v1602
        %1667 = vst.msk [vmem:[%s516 + $0x24] sm:$0xf] %vm1297, %v1603
        %1668 = vst.msk [vmem:[%s516 + $0x28] sm:$0xf] %vm1297, %v1604
        %1669 = vst.msk [vmem:[%s516 + $0x2c] sm:$0xf] %vm1297, %v1605
        %1670 = vst.msk [vmem:[%s516 + $0x30] sm:$0xf] %vm1297, %v1606
        %1671 = vst.msk [vmem:[%s516 + $0x34] sm:$0xf] %vm1297, %v1607
        %1672 = vst.msk [vmem:[%s516 + $0x38] sm:$0xf] %vm1297, %v1608
        %1673 = vst.msk [vmem:[%s516 + $0x3c] sm:$0xf] %vm1297, %v1609
        %1674 = vst.msk [vmem:[%s516 + $0x40] sm:$0xf] %vm1297, %v1610
        %1675 = vst.msk [vmem:[%s516 + $0x44] sm:$0xf] %vm1297, %v1611
        %1676 = vst.msk [vmem:[%s516 + $0x48] sm:$0xf] %vm1297, %v1612
        %1677 = vst.msk [vmem:[%s516 + $0x4c] sm:$0xf] %vm1297, %v1613
        %1678 = vst.msk [vmem:[%s516 + $0x50] sm:$0xf] %vm1297, %v1614
        %1679 = vst.msk [vmem:[%s516 + $0x54] sm:$0xf] %vm1297, %v1615
        %1680 = vst.msk [vmem:[%s516 + $0x58] sm:$0xf] %vm1297, %v1616
        %1681 = vst.msk [vmem:[%s516 + $0x5c] sm:$0xf] %vm1297, %v1617
        %1682 = vst.msk [vmem:[%s516 + $0x60] sm:$0xf] %vm1297, %v1618
        %1683 = vst.msk [vmem:[%s516 + $0x64] sm:$0xf] %vm1297, %v1619
        %1684 = vst.msk [vmem:[%s516 + $0x68] sm:$0xf] %vm1297, %v1620
        %1685 = vst.msk [vmem:[%s516 + $0x6c] sm:$0xf] %vm1297, %v1621
        %1686 = vst.msk [vmem:[%s516 + $0x70] sm:$0xf] %vm1297, %v1622
        %1687 = vst.msk [vmem:[%s516 + $0x74] sm:$0xf] %vm1297, %v1623
        %1688 = vst.msk [vmem:[%s516 + $0x78] sm:$0xf] %vm1297, %v1624
        %1689 = vst.msk [vmem:[%s516 + $0x7c] sm:$0xf] %vm1297, %v1625
        %s1690 = smul.u32 32, %s32
        %p1691 = scmp.lt.s32.totalorder %s31, 1
        %s1692 = scalar_select %p1691, %s31, 1
        %p1693 = scmp.lt.s32.totalorder %s1690, 31
        %s1694 = scalar_select %p1693, %s1690, 31
        %s1695 = smul.addr %s1692, 32
        %s1696 = sadd.s32 %s1694, %s1695
        %s1697 = smul.addr %s1696, 4
        %s1698 = scalar_lea.vmem %s9, %s1697
        %s1699 = sand.u32 %s283, 1
        %s1700 = scalar_lea.sflag [#allocation4], %s1699
        %s1701 = sand.u32 %s283, 1
        %s1702 = smul.addr %s1701, 64
        %s1703 = scalar_lea.vmem [#allocation5], %s1702
        %s1704 = smul.u32 32, %s32
        %p1705 = scmp.lt.s32.totalorder %s31, 1
        %s1706 = scalar_select %p1705, %s31, 1
        %p1707 = scmp.lt.s32.totalorder %s1704, 31
        %s1708 = scalar_select %p1707, %s1704, 31
        %s1709 = smul.addr %s1706, 32
        %s1710 = sadd.s32 %s1708, %s1709
        %s1711 = smul.addr %s1710, 4
        %s1712 = scalar_lea.vmem %s11, %s1711
        // Predicated region
        $region61: #{tpu_custom_call.1} parent=55 // pred_check
          %p1713 = pneg %p265
        $region62: #{tpu_custom_call.1} parent=55 // pred_check_branch
          %1715 = sbr.rel (%p1713) target = $region64
        $region63: #{tpu_custom_call.1} parent=55 // pred_region
          %s1716 = smul.u32 32, %s32
        $region64: #{tpu_custom_call.1} parent=55 // pred_fallthru
          _
        // Predicated region
        $region65: #{tpu_custom_call.1} parent=55 // pred_check
          %p1717 = pneg %p293
        $region66: #{tpu_custom_call.1} parent=55 // pred_check_branch
          %1719 = sbr.rel (%p1717) target = $region68
        $region67: #{tpu_custom_call.1} parent=55 // pred_region
          %s1720 = smul.u32 2, %s32
          %s1722 = ssub.s32 1024, 1024
          %1723 = vsyncadd %s1700, %s1722
          %s1724 = smul.addr %s31, 16
          %s1725 = sadd.s32 %s1720, %s1724
          %s1726 = smul.addr %s1725, 64
          %s1727 = scalar_lea.hbm %s10, %s1726
          %s1728 = sshll.u32 %s1703, 4
          %s1729 = int_to_ptr.vmem [resolvable:$true] %s1728
          %1734 = dma.vmem_to_hbm [thread:$0]  %s1729, 1024, %s1727, %s1700, 128, 128, 8
        $region68: #{tpu_custom_call.1} parent=55 // pred_fallthru
          _
        // Predicated region
        $region69: #{tpu_custom_call.1} parent=55 // pred_check
          %p1735 = pneg %p321
        $region70: #{tpu_custom_call.1} parent=55 // pred_check_branch
          %1737 = sbr.rel (%p1735) target = $region72
        $region71: #{tpu_custom_call.1} parent=55 // pred_region
          %s1738 = smul.u32 32, %s32
        $region72: #{tpu_custom_call.1} parent=55 // pred_fallthru
          _
      $region56: #{tpu_custom_call.1} parent=5 // pred_fallthru
        _
      %p1739 = scmp.le.s32.totalorder 2, %s22
      // Predicated region
      $region73: #{tpu_custom_call.1} parent=5 // pred_check
        %p1740 = pneg %p1739
      $region74: #{tpu_custom_call.1} parent=5 // pred_check_branch
        %1742 = sbr.rel (%p1740) target = $region76
      $region75: #{tpu_custom_call.1} parent=5 // pred_region
        %s1743 = ssub.s32 %s22, 2
        // Predicated region
        $region77: #{tpu_custom_call.1} parent=75 // pred_check
          %p1744 = pneg %p271
        $region78: #{tpu_custom_call.1} parent=75 // pred_check_branch
          %1746 = sbr.rel (%p1744) target = $region80
        $region79: #{tpu_custom_call.1} parent=75 // pred_region
          %s1747 = smul.u32 32, %s34
          %p1748 = scmp.lt.s32.totalorder %s33, 1
          %s1749 = scalar_select %p1748, %s33, 1
          %p1750 = scmp.lt.s32.totalorder %s1747, 31
          %s1751 = scalar_select %p1750, %s1747, 31
          %s1752 = smul.addr %s1749, 32
          %s1753 = sadd.s32 %s1751, %s1752
          %s1754 = smul.addr %s1753, 4
          %s1755 = scalar_lea.vmem %s9, %s1754
        $region80: #{tpu_custom_call.1} parent=75 // pred_fallthru
          _
        // Predicated region
        $region81: #{tpu_custom_call.1} parent=75 // pred_check
          %p1756 = pneg %p299
        $region82: #{tpu_custom_call.1} parent=75 // pred_check_branch
          %1758 = sbr.rel (%p1756) target = $region84
        $region83: #{tpu_custom_call.1} parent=75 // pred_region
          %s1759 = sand.u32 %s284, 1
          %s1760 = scalar_lea.sflag [#allocation4], %s1759
          %s1761 = sand.u32 %s284, 1
          %s1762 = smul.addr %s1761, 64
          %s1763 = scalar_lea.vmem [#allocation5], %s1762
          %1764 = dma.done %s1760, 1024
        $region84: #{tpu_custom_call.1} parent=75 // pred_fallthru
          _
        // Predicated region
        $region85: #{tpu_custom_call.1} parent=75 // pred_check
          %p1765 = pneg %p327
        $region86: #{tpu_custom_call.1} parent=75 // pred_check_branch
          %1767 = sbr.rel (%p1765) target = $region88
        $region87: #{tpu_custom_call.1} parent=75 // pred_region
          %s1768 = smul.u32 32, %s34
          %p1769 = scmp.lt.s32.totalorder %s33, 1
          %s1770 = scalar_select %p1769, %s33, 1
          %p1771 = scmp.lt.s32.totalorder %s1768, 31
          %s1772 = scalar_select %p1771, %s1768, 31
          %s1773 = smul.addr %s1770, 32
          %s1774 = sadd.s32 %s1772, %s1773
          %s1775 = smul.addr %s1774, 4
          %s1776 = scalar_lea.vmem %s11, %s1775
        $region88: #{tpu_custom_call.1} parent=75 // pred_fallthru
          _
      $region76: #{tpu_custom_call.1} parent=5 // pred_fallthru
        _
    $region6: #{tpu_custom_call.1} parent=1 // loop_footer
      %s26 = sadd.s32 1, %s22
    $region7: #{tpu_custom_call.1} parent=1 // loop_footer_branch
      %21 = sbr.rel target = $region3
    $region8: #{tpu_custom_call.1} parent=1 // loop_exit
      _
    %1777 = vsyncpa [#allocation3], 1
    %s1778 = scalar_lea.sflag [#allocation3], 1
    %1779 = vsyncpa %s1778, 1
    %1780 = vsyncpa [#allocation4], 1
    %s1781 = scalar_lea.sflag [#allocation4], 1
    %1782 = vsyncpa %s1781, 1

</llo_original>
